<compile_context>
chip_gen: v7x
topology: tpu7x:2x2x1
jax: 0.10.0
libtpu: 0.0.40
codegen_flags: <defaults>
</compile_context>

<pallas_src>
import functools
import math

import jax
import jax.numpy as jnp
from jax.experimental import pallas as pl
from jax.experimental.pallas import tpu as pltpu

# ---------------- config (small, BERT-like) ----------------
B = 2             # batch per encoded sequence set
S = 8             # sequence length
H = 32            # hidden size
NH = 2            # attention heads
DH = H // NH      # head dim
I = 64            # FFN intermediate size
L = 2             # transformer layers
VOCAB = 100
VOCAB_PAD = 128   # embedding table padded to a lane-aligned row count
MAX_POS = 16
LN_EPS = 1e-12

W_HIN = 3 * H + H + I        # fused [qkv_w | o_w | i_w] column width
VEC_W = 3 * H                # padded width for per-layer bias / LN rows


def _layer_norm(x, g, b, eps):
    mu = jnp.mean(x, axis=-1, keepdims=True)
    var = jnp.mean(jnp.square(x - mu), axis=-1, keepdims=True)
    return (x - mu) * jax.lax.rsqrt(var + eps) * g + b


# ---------------- fused bi-encoder kernel ----------------
# grid = (num_encodes, num_layers); axis 0 "parallel", axis 1 "arbitrary".
def _encoder_kernel(model_map_ref,   # SMEM (E,) int32 scalar prefetch (used by index_maps)
                    ids_ref,         # (B*S, 1) int32   : this encode's token ids
                    mask_ref,        # (B, S)   f32     : this encode's attention mask
                    wemb_ref,        # (VOCAB_PAD, H) f32 : this model's word embeddings
                    pos_ref,         # (S, H)   f32     : positional embeddings
                    evec_ref,        # (3, H)   f32     : emb_ln_g / emb_ln_b / token_type0
                    lvec_ref,        # (8, VEC_W) f32   : this layer's biases / LN params
                    w_hin_ref,       # (H, W_HIN) bf16  : this layer's [qkv_w | o_w | i_w]
                    w_out_ref,       # (I, H)   bf16    : this layer's FFN output weight
                    pooled_ref,      # (B, H)   f32 out : pooled [CLS] rows
                    h_ref,           # VMEM scratch (B*S, H) f32 : hidden state carry
                    *, num_layers, batch, seq, nheads, dhead, inter, eps):
    del model_map_ref
    hdim = nheads * dhead
    scale = 1.0 / math.sqrt(dhead)
    l = pl.program_id(1)

    # ---- first layer step: embedding gather (one-hot MXU) + embedding LayerNorm ----
    @pl.when(l == 0)
    def _embed():
        vocab_pad = wemb_ref.shape[0]
        ids = ids_ref[...]                                              # (B*S, 1)
        lanes = jax.lax.broadcasted_iota(jnp.int32, (batch * seq, vocab_pad), 1)
        onehot = (lanes == ids).astype(jnp.float32)                     # (B*S, VOCAB_PAD)
        emb = jnp.dot(onehot, wemb_ref[...],
                      preferred_element_type=jnp.float32)               # (B*S, H)
        pos = jnp.concatenate([pos_ref[...]] * batch, axis=0)           # (B*S, H)
        emb = emb + pos + evec_ref[2:3, :]                              # token_type_ids == 0
        h_ref[...] = _layer_norm(emb, evec_ref[0:1, :], evec_ref[1:2, :], eps)

    # ---- transformer layer l ----
    x = h_ref[...]                                                      # (B*S, H) f32
    mask_bias = (1.0 - mask_ref[...]) * -10000.0                        # (B, S) additive bias

    w = w_hin_ref[...]                                                  # (H, W_HIN) bf16
    lv = lvec_ref[...]                                                  # (8, VEC_W) f32
    qkv_b = lv[0:1, :3 * hdim]
    o_b = lv[1:2, :hdim]
    ln1_g = lv[2:3, :hdim]
    ln1_b = lv[3:4, :hdim]
    i_b = lv[4:5, :inter]
    out_b = lv[5:6, :hdim]
    ln2_g = lv[6:7, :hdim]
    ln2_b = lv[7:8, :hdim]

    # fused QKV projection (bf16 MXU operands, f32 accumulation)
    qkv = jnp.dot(x.astype(jnp.bfloat16), w[:, :3 * hdim],
                  preferred_element_type=jnp.float32) + qkv_b           # (B*S, 3H)

    q = qkv[:, :hdim].reshape(batch, seq, hdim)
    k = qkv[:, hdim:2 * hdim].reshape(batch, seq, hdim)
    v = qkv[:, 2 * hdim:].reshape(batch, seq, hdim)

    # attention: per head, batched over the batch dim; contexts stay in registers
    ctx_heads = []
    for h in range(nheads):
        c0 = h * dhead
        qh = q[:, :, c0:c0 + dhead]                                     # (B, S, DH)
        kh = k[:, :, c0:c0 + dhead]
        vh = v[:, :, c0:c0 + dhead]
        s = jnp.einsum('bqd,bkd->bqk', qh, kh,
                       preferred_element_type=jnp.float32) * scale      # (B, S, S)
        s = s + mask_bias[:, None, :]
        s = s - jnp.max(s, axis=-1, keepdims=True)
        p = jnp.exp(s)
        p = p / jnp.sum(p, axis=-1, keepdims=True)                      # exact softmax
        ctx_heads.append(jnp.einsum('bqk,bkd->bqd', p, vh,
                                    preferred_element_type=jnp.float32))
    ctx = jnp.concatenate(ctx_heads, axis=-1).reshape(batch * seq, hdim)

    attn = jnp.dot(ctx.astype(jnp.bfloat16), w[:, 3 * hdim:4 * hdim],
                   preferred_element_type=jnp.float32) + o_b
    h1 = _layer_norm(attn + x, ln1_g, ln1_b, eps)

    ff = jnp.dot(h1.astype(jnp.bfloat16), w[:, 4 * hdim:],
                 preferred_element_type=jnp.float32) + i_b
    # TODO(synk): HF BERT uses erf-based gelu; tanh approximation used for TPU lowering.
    ff = jax.nn.gelu(ff, approximate=True)
    ff = jnp.dot(ff.astype(jnp.bfloat16), w_out_ref[...],
                 preferred_element_type=jnp.float32) + out_b
    x_new = _layer_norm(ff + h1, ln2_g, ln2_b, eps)
    h_ref[...] = x_new

    # ---- last layer: emit only the pooled [CLS] rows ----
    @pl.when(l == num_layers - 1)
    def _emit():
        pooled_ref[...] = jnp.concatenate(
            [x_new[b0 * seq:b0 * seq + 1, :] for b0 in range(batch)], axis=0)


def encode_pooled(params, ids, masks, model_map):
    """Single fused pallas_call over (encodes, layers). Returns pooled (E, B, H)."""
    e_num, batch, seq = ids.shape
    ids_col = ids.reshape(e_num, batch * seq, 1).astype(jnp.int32)
    masks_f = masks.astype(jnp.float32)
    pos_se = params["pos_emb"][:, :seq, :]                              # (2, S, H)

    grid_spec = pltpu.PrefetchScalarGridSpec(
        num_scalar_prefetch=1,
        grid=(e_num, L),
        in_specs=[
            pl.BlockSpec((None, batch * seq, 1), lambda e, l, m: (e, 0, 0)),
            pl.BlockSpec((None, batch, seq), lambda e, l, m: (e, 0, 0)),
            pl.BlockSpec((None, VOCAB_PAD, H), lambda e, l, m: (m[e], 0, 0)),
            pl.BlockSpec((None, seq, H), lambda e, l, m: (m[e], 0, 0)),
            pl.BlockSpec((None, 3, H), lambda e, l, m: (m[e], 0, 0)),
            pl.BlockSpec((None, None, 8, VEC_W), lambda e, l, m: (m[e], l, 0, 0)),
            pl.BlockSpec((None, None, H, W_HIN), lambda e, l, m: (m[e], l, 0, 0)),
            pl.BlockSpec((None, None, I, H), lambda e, l, m: (m[e], l, 0, 0)),
        ],
        out_specs=pl.BlockSpec((None, batch, H), lambda e, l, m: (e, 0, 0)),
        scratch_shapes=[pltpu.VMEM((batch * seq, H), jnp.float32)],
    )

    kernel = functools.partial(
        _encoder_kernel, num_layers=L, batch=batch, seq=seq,
        nheads=NH, dhead=DH, inter=I, eps=LN_EPS)

    return pl.pallas_call(
        kernel,
        grid_spec=grid_spec,
        out_shape=jax.ShapeDtypeStruct((e_num, batch, H), jnp.float32),
        compiler_params=pltpu.CompilerParams(
            dimension_semantics=("parallel", "arbitrary")),
    )(model_map, ids_col, masks_f,
      params["word_emb"], pos_se, params["emb_vecs"],
      params["layer_vecs"], params["w_hin"], params["w_out"])


# ---------------- BiBertEncoder forward (wrapper) ----------------

@jax.jit
def bibert_embs(params, query_ids, mask_q, ids_a, mask_a):
    ids = jnp.stack([query_ids, ids_a], axis=0)
    masks = jnp.stack([mask_q, mask_a], axis=0).astype(jnp.float32)
    model_map = jnp.array([0, 1], jnp.int32)        # 0 = question_model, 1 = ctx_model
    pooled = encode_pooled(params, ids, masks, model_map)
    return pooled[0], pooled[1]


@jax.jit
def bibert_triplet_loss(params, query_ids, mask_q, ids_a, mask_a, ids_b, mask_b):
    ids = jnp.stack([query_ids, ids_a, ids_b], axis=0)
    masks = jnp.stack([mask_q, mask_a, mask_b], axis=0).astype(jnp.float32)
    model_map = jnp.array([0, 1, 1], jnp.int32)
    pooled = encode_pooled(params, ids, masks, model_map)
    q_embs, a_embs, b_embs = pooled[0], pooled[1], pooled[2]
    # Triplet loss in plain XLA (cheaper than a kernel launch at this size).
    s_pos = jnp.sum(q_embs * a_embs, axis=-1)
    s_neg = jnp.sum(q_embs * b_embs, axis=-1)
    logits = jnp.stack([s_pos, s_neg], axis=1)
    lsm = jax.nn.log_softmax(logits, axis=1)
    return jnp.mean(-lsm[:, 0])


def bibert_forward(params, query_ids, attention_mask_q,
                   input_ids_a=None, attention_mask_a=None,
                   input_ids_b=None, attention_mask_b=None):
    if input_ids_b is None:
        return bibert_embs(params, query_ids, attention_mask_q,
                           input_ids_a, attention_mask_a)
    return (bibert_triplet_loss(params, query_ids, attention_mask_q,
                                input_ids_a, attention_mask_a,
                                input_ids_b, attention_mask_b),)


# ---------------- deterministic packed parameter init ----------------

def init_bibert_params(key):
    """Two independent BERT encoders (question_model / ctx_model), packed for the
    fused kernel. Leading axis 0 of every array is the model index."""
    def one_model(k):
        ks = jax.random.split(k, 8)
        n = lambda kk, shape: 0.02 * jax.random.normal(kk, shape, jnp.float32)

        word = jnp.zeros((VOCAB_PAD, H), jnp.float32).at[:VOCAB].set(n(ks[0], (VOCAB, H)))
        pos = n(ks[1], (MAX_POS, H))
        tok0 = n(ks[2], (H,))                                  # token_type_ids == 0 embedding
        emb_vecs = jnp.stack([jnp.ones((H,), jnp.float32),     # embedding LN gamma
                              jnp.zeros((H,), jnp.float32),    # embedding LN beta
                              tok0], axis=0)                   # (3, H)

        qkv_w = n(ks[3], (L, H, 3 * H))
        o_w = n(ks[4], (L, H, H))
        i_w = n(ks[5], (L, H, I))
        out_w = n(ks[6], (L, I, H))
        w_hin = jnp.concatenate([qkv_w, o_w, i_w], axis=-1).astype(jnp.bfloat16)
        w_out = out_w.astype(jnp.bfloat16)

        def row(v):
            return jnp.pad(v, (0, VEC_W - v.shape[0]))
        zeros_h = jnp.zeros((H,), jnp.float32)
        ones_h = jnp.ones((H,), jnp.float32)
        lrows = jnp.stack([
            jnp.zeros((3 * H,), jnp.float32),   # qkv bias
            row(zeros_h),                       # attn output bias
            row(ones_h),                        # LN1 gamma
            row(zeros_h),                       # LN1 beta
            row(jnp.zeros((I,), jnp.float32)),  # FFN intermediate bias
            row(zeros_h),                       # FFN output bias
            row(ones_h),                        # LN2 gamma
            row(zeros_h),                       # LN2 beta
        ], axis=0)                              # (8, VEC_W)
        layer_vecs = jnp.tile(lrows[None], (L, 1, 1))          # (L, 8, VEC_W)

        return dict(word_emb=word, pos_emb=pos, emb_vecs=emb_vecs,
                    layer_vecs=layer_vecs, w_hin=w_hin, w_out=w_out)

    kq, kc = jax.random.split(key)
    mq, mc = one_model(kq), one_model(kc)
    return {name: jnp.stack([mq[name], mc[name]], axis=0) for name in mq}


if __name__ == "__main__":
    root = jax.random.PRNGKey(0)
    kp, k1, k2, k3 = jax.random.split(root, 4)

    params = init_bibert_params(kp)

    query_ids = jax.random.randint(k1, (B, S), 0, VOCAB, dtype=jnp.int32)
    ids_a = jax.random.randint(k2, (B, S), 0, VOCAB, dtype=jnp.int32)
    ids_b = jax.random.randint(k3, (B, S), 0, VOCAB, dtype=jnp.int32)

    mask_q = jnp.ones((B, S), jnp.int32).at[:, -1].set(0)   # some padding
    mask_a = jnp.ones((B, S), jnp.int32)
    mask_b = jnp.ones((B, S), jnp.int32).at[:, -2:].set(0)

    # Embedding-only path (input_ids_b is None): returns (q_embs, a_embs)
    q_embs, a_embs = bibert_forward(params, query_ids, mask_q, ids_a, mask_a)
    jax.block_until_ready((q_embs, a_embs))
    assert q_embs.shape == (B, H) and a_embs.shape == (B, H)
    assert bool(jnp.all(jnp.isfinite(q_embs))) and bool(jnp.all(jnp.isfinite(a_embs)))

    # Full triplet path: returns (loss,)
    (loss,) = bibert_forward(params, query_ids, mask_q, ids_a, mask_a, ids_b, mask_b)
    loss = jax.block_until_ready(loss)
    assert loss.shape == () and bool(jnp.isfinite(loss))

    print("KERNEL_OK")
</pallas_src>

<mosaic_0001>
module attributes {stable_mosaic.version = 11 : i64} {
  func.func @_encoder_kernel(%arg0: i32, %arg1: i32, %arg2: memref<2xi32, #tpu.memory_space<smem>>, %arg3: memref<1x16x1xi32, #tpu.memory_space<vmem>>, %arg4: memref<1x2x8xf32, #tpu.memory_space<vmem>>, %arg5: memref<1x128x32xf32, #tpu.memory_space<vmem>>, %arg6: memref<1x8x32xf32, #tpu.memory_space<vmem>>, %arg7: memref<1x3x32xf32, #tpu.memory_space<vmem>>, %arg8: memref<1x1x8x96xf32, #tpu.memory_space<vmem>>, %arg9: memref<1x1x32x192xbf16, #tpu.memory_space<vmem>>, %arg10: memref<1x1x64x32xbf16, #tpu.memory_space<vmem>>, %arg11: memref<1x2x32xf32, #tpu.memory_space<vmem>>, %arg12: memref<16x32xf32, #tpu.memory_space<vmem>>) attributes {dimension_semantics = [#tpu.dimension_semantics<parallel>, #tpu.dimension_semantics<arbitrary>], iteration_bounds = array<i64: 2, 2>, scalar_prefetch = 1 : i64, scratch_operands = 1 : i64, tpu.core_type = #tpu.core_type<tc>, window_params = [{transform_indices = @transform_0, window_bounds = array<i64: 1, 16, 1>}, {transform_indices = @transform_1, window_bounds = array<i64: 1, 2, 8>}, {transform_indices = @transform_2, window_bounds = array<i64: 1, 128, 32>}, {transform_indices = @transform_3, window_bounds = array<i64: 1, 8, 32>}, {transform_indices = @transform_4, window_bounds = array<i64: 1, 3, 32>}, {transform_indices = @transform_5, window_bounds = array<i64: 1, 1, 8, 96>}, {transform_indices = @transform_6, window_bounds = array<i64: 1, 1, 32, 192>}, {transform_indices = @transform_7, window_bounds = array<i64: 1, 1, 64, 32>}, {transform_indices = @transform_8, window_bounds = array<i64: 1, 2, 32>}]} {
    %c0_i32 = arith.constant 0 : i32
    %0 = arith.cmpi eq, %arg1, %c0_i32 : i32
    %1 = arith.extui %0 : i1 to i32
    %c0_i32_0 = arith.constant 0 : i32
    %2 = arith.cmpi ne, %1, %c0_i32_0 : i32
    scf.if %2 {
      %c0_49 = arith.constant 0 : index
      %c0_50 = arith.constant 0 : index
      %c0_51 = arith.constant 0 : index
      %152 = vector.load %arg3[%c0_49, %c0_50, %c0_51] : memref<1x16x1xi32, #tpu.memory_space<vmem>>, vector<1x16x1xi32>
      %153 = vector.shape_cast %152 : vector<1x16x1xi32> to vector<16x1xi32>
      %154 = tpu.iota {dimensions = array<i32: 1>} : vector<16x128xi32>
      %155 = vector.broadcast %153 : vector<16x1xi32> to vector<16x128xi32>
      %156 = arith.cmpi eq, %154, %155 : vector<16x128xi32>
      %157 = arith.extui %156 : vector<16x128xi1> to vector<16x128xi32>
      %158 = arith.sitofp %157 : vector<16x128xi32> to vector<16x128xf32>
      %c0_52 = arith.constant 0 : index
      %c0_53 = arith.constant 0 : index
      %c0_54 = arith.constant 0 : index
      %159 = vector.load %arg5[%c0_52, %c0_53, %c0_54] : memref<1x128x32xf32, #tpu.memory_space<vmem>>, vector<1x128x32xf32>
      %160 = vector.shape_cast %159 : vector<1x128x32xf32> to vector<128x32xf32>
      %cst_55 = arith.constant dense<0.000000e+00> : vector<16x32xf32>
      %161 = tpu.matmul %158, %160, %cst_55 {dimension_numbers = #tpu.dot_dimension_numbers<[1], [0], [0], [1], [0, 0, 1, 1], [], []>} : vector<16x128xf32>, vector<128x32xf32>, vector<16x32xf32> -> vector<16x32xf32>
      %c0_56 = arith.constant 0 : index
      %c0_57 = arith.constant 0 : index
      %c0_58 = arith.constant 0 : index
      %162 = vector.load %arg6[%c0_56, %c0_57, %c0_58] : memref<1x8x32xf32, #tpu.memory_space<vmem>>, vector<1x8x32xf32>
      %163 = vector.shape_cast %162 : vector<1x8x32xf32> to vector<8x32xf32>
      %164 = tpu.concatenate %163, %163 in 0 : vector<8x32xf32>, vector<8x32xf32> -> vector<16x32xf32>
      %165 = arith.addf %161, %164 : vector<16x32xf32>
      %c0_59 = arith.constant 0 : index
      %c2 = arith.constant 2 : index
      %c0_60 = arith.constant 0 : index
      %166 = vector.load %arg7[%c0_59, %c2, %c0_60] : memref<1x3x32xf32, #tpu.memory_space<vmem>>, vector<1x1x32xf32>
      %167 = vector.shape_cast %166 : vector<1x1x32xf32> to vector<1x32xf32>
      %168 = vector.broadcast %167 : vector<1x32xf32> to vector<16x32xf32>
      %169 = arith.addf %165, %168 : vector<16x32xf32>
      %c0_61 = arith.constant 0 : index
      %c0_62 = arith.constant 0 : index
      %c0_63 = arith.constant 0 : index
      %170 = vector.load %arg7[%c0_61, %c0_62, %c0_63] : memref<1x3x32xf32, #tpu.memory_space<vmem>>, vector<1x1x32xf32>
      %171 = vector.shape_cast %170 : vector<1x1x32xf32> to vector<1x32xf32>
      %c0_64 = arith.constant 0 : index
      %c1 = arith.constant 1 : index
      %c0_65 = arith.constant 0 : index
      %172 = vector.load %arg7[%c0_64, %c1, %c0_65] : memref<1x3x32xf32, #tpu.memory_space<vmem>>, vector<1x1x32xf32>
      %173 = vector.shape_cast %172 : vector<1x1x32xf32> to vector<1x32xf32>
      %cst_66 = arith.constant dense<0.000000e+00> : vector<16xf32>
      %174 = vector.multi_reduction <add>, %169, %cst_66 [1] : vector<16x32xf32> to vector<16xf32>
      %175 = vector.shape_cast %174 : vector<16xf32> to vector<16x1xf32>
      %cst_67 = arith.constant 3.200000e+01 : f32
      %176 = vector.broadcast %cst_67 : f32 to vector<16x1xf32>
      %177 = arith.divf %175, %176 : vector<16x1xf32>
      %178 = vector.broadcast %177 : vector<16x1xf32> to vector<16x32xf32>
      %179 = arith.subf %169, %178 : vector<16x32xf32>
      %180 = arith.mulf %179, %179 : vector<16x32xf32>
      %cst_68 = arith.constant dense<0.000000e+00> : vector<16xf32>
      %181 = vector.multi_reduction <add>, %180, %cst_68 [1] : vector<16x32xf32> to vector<16xf32>
      %182 = vector.shape_cast %181 : vector<16xf32> to vector<16x1xf32>
      %cst_69 = arith.constant 3.200000e+01 : f32
      %183 = vector.broadcast %cst_69 : f32 to vector<16x1xf32>
      %184 = arith.divf %182, %183 : vector<16x1xf32>
      %185 = vector.broadcast %177 : vector<16x1xf32> to vector<16x32xf32>
      %186 = arith.subf %169, %185 : vector<16x32xf32>
      %cst_70 = arith.constant 9.99999996E-13 : f32
      %187 = vector.broadcast %cst_70 : f32 to vector<16x1xf32>
      %188 = arith.addf %184, %187 : vector<16x1xf32>
      %189 = math.rsqrt %188 : vector<16x1xf32>
      %190 = vector.broadcast %189 : vector<16x1xf32> to vector<16x32xf32>
      %191 = arith.mulf %186, %190 : vector<16x32xf32>
      %192 = vector.broadcast %171 : vector<1x32xf32> to vector<16x32xf32>
      %193 = arith.mulf %191, %192 : vector<16x32xf32>
      %194 = vector.broadcast %173 : vector<1x32xf32> to vector<16x32xf32>
      %195 = arith.addf %193, %194 : vector<16x32xf32>
      %c0_71 = arith.constant 0 : index
      %c0_72 = arith.constant 0 : index
      %196 = vector.load %arg12[%c0_71, %c0_72] : memref<16x32xf32, #tpu.memory_space<vmem>>, vector<16x32xf32>
      tpu.vector_store %arg12[%c0_71, %c0_72], %195 {strides = array<i32>} : memref<16x32xf32, #tpu.memory_space<vmem>>, vector<16x32xf32>,
    } else {
    }
    %c0 = arith.constant 0 : index
    %c0_1 = arith.constant 0 : index
    %3 = vector.load %arg12[%c0, %c0_1] : memref<16x32xf32, #tpu.memory_space<vmem>>, vector<16x32xf32>
    %c0_2 = arith.constant 0 : index
    %c0_3 = arith.constant 0 : index
    %c0_4 = arith.constant 0 : index
    %4 = vector.load %arg4[%c0_2, %c0_3, %c0_4] : memref<1x2x8xf32, #tpu.memory_space<vmem>>, vector<1x2x8xf32>
    %5 = vector.shape_cast %4 : vector<1x2x8xf32> to vector<2x8xf32>
    %cst = arith.constant 1.000000e+00 : f32
    %6 = vector.broadcast %cst : f32 to vector<2x8xf32>
    %7 = arith.subf %6, %5 : vector<2x8xf32>
    %cst_5 = arith.constant -1.000000e+04 : f32
    %8 = vector.broadcast %cst_5 : f32 to vector<2x8xf32>
    %9 = arith.mulf %7, %8 : vector<2x8xf32>
    %c0_6 = arith.constant 0 : index
    %c0_7 = arith.constant 0 : index
    %c0_8 = arith.constant 0 : index
    %c0_9 = arith.constant 0 : index
    %10 = vector.load %arg9[%c0_6, %c0_7, %c0_8, %c0_9] : memref<1x1x32x192xbf16, #tpu.memory_space<vmem>>, vector<1x1x32x192xbf16>
    %11 = vector.shape_cast %10 : vector<1x1x32x192xbf16> to vector<32x192xbf16>
    %c0_10 = arith.constant 0 : index
    %c0_11 = arith.constant 0 : index
    %c0_12 = arith.constant 0 : index
    %c0_13 = arith.constant 0 : index
    %12 = vector.load %arg8[%c0_10, %c0_11, %c0_12, %c0_13] : memref<1x1x8x96xf32, #tpu.memory_space<vmem>>, vector<1x1x8x96xf32>
    %13 = vector.shape_cast %12 : vector<1x1x8x96xf32> to vector<8x96xf32>
    %14 = vector.extract_strided_slice %13 {offsets = [0, 0], sizes = [1, 96], strides = [1, 1]} : vector<8x96xf32> to vector<1x96xf32>
    %15 = vector.extract_strided_slice %13 {offsets = [1, 0], sizes = [1, 32], strides = [1, 1]} : vector<8x96xf32> to vector<1x32xf32>
    %16 = vector.extract_strided_slice %13 {offsets = [2, 0], sizes = [1, 32], strides = [1, 1]} : vector<8x96xf32> to vector<1x32xf32>
    %17 = vector.extract_strided_slice %13 {offsets = [3, 0], sizes = [1, 32], strides = [1, 1]} : vector<8x96xf32> to vector<1x32xf32>
    %18 = vector.extract_strided_slice %13 {offsets = [4, 0], sizes = [1, 64], strides = [1, 1]} : vector<8x96xf32> to vector<1x64xf32>
    %19 = vector.extract_strided_slice %13 {offsets = [5, 0], sizes = [1, 32], strides = [1, 1]} : vector<8x96xf32> to vector<1x32xf32>
    %20 = vector.extract_strided_slice %13 {offsets = [6, 0], sizes = [1, 32], strides = [1, 1]} : vector<8x96xf32> to vector<1x32xf32>
    %21 = vector.extract_strided_slice %13 {offsets = [7, 0], sizes = [1, 32], strides = [1, 1]} : vector<8x96xf32> to vector<1x32xf32>
    %22 = arith.truncf %3 : vector<16x32xf32> to vector<16x32xbf16>
    %23 = vector.extract_strided_slice %11 {offsets = [0, 0], sizes = [32, 96], strides = [1, 1]} : vector<32x192xbf16> to vector<32x96xbf16>
    %cst_14 = arith.constant dense<0.000000e+00> : vector<16x96xf32>
    %24 = tpu.matmul %22, %23, %cst_14 {dimension_numbers = #tpu.dot_dimension_numbers<[1], [0], [0], [1], [0, 0, 1, 1], [], []>} : vector<16x32xbf16>, vector<32x96xbf16>, vector<16x96xf32> -> vector<16x96xf32>
    %25 = vector.broadcast %14 : vector<1x96xf32> to vector<16x96xf32>
    %26 = arith.addf %24, %25 : vector<16x96xf32>
    %27 = vector.extract_strided_slice %26 {offsets = [0, 0], sizes = [16, 32], strides = [1, 1]} : vector<16x96xf32> to vector<16x32xf32>
    %28 = vector.shape_cast %27 : vector<16x32xf32> to vector<2x8x32xf32>
    %29 = vector.extract_strided_slice %26 {offsets = [0, 32], sizes = [16, 32], strides = [1, 1]} : vector<16x96xf32> to vector<16x32xf32>
    %30 = vector.shape_cast %29 : vector<16x32xf32> to vector<2x8x32xf32>
    %31 = vector.extract_strided_slice %26 {offsets = [0, 64], sizes = [16, 32], strides = [1, 1]} : vector<16x96xf32> to vector<16x32xf32>
    %32 = vector.shape_cast %31 : vector<16x32xf32> to vector<2x8x32xf32>
    %33 = vector.extract_strided_slice %28 {offsets = [0, 0, 0], sizes = [2, 8, 16], strides = [1, 1, 1]} : vector<2x8x32xf32> to vector<2x8x16xf32>
    %34 = vector.extract_strided_slice %30 {offsets = [0, 0, 0], sizes = [2, 8, 16], strides = [1, 1, 1]} : vector<2x8x32xf32> to vector<2x8x16xf32>
    %35 = vector.extract_strided_slice %32 {offsets = [0, 0, 0], sizes = [2, 8, 16], strides = [1, 1, 1]} : vector<2x8x32xf32> to vector<2x8x16xf32>
    "tpu.trace_start"() <{level = 10 : i32, message = "bqd,bkd->bqk"}> : () -> ()
    %cst_15 = arith.constant dense<0.000000e+00> : vector<2x8x8xf32>
    %36 = tpu.matmul %33, %34, %cst_15 {dimension_numbers = #tpu.dot_dimension_numbers<[2], [2], [1], [1], [0, 0, 0, 1, 1, 1], [0], [0]>} : vector<2x8x16xf32>, vector<2x8x16xf32>, vector<2x8x8xf32> -> vector<2x8x8xf32>
    "tpu.trace_stop"() : () -> ()
    %cst_16 = arith.constant 2.500000e-01 : f32
    %37 = vector.broadcast %cst_16 : f32 to vector<2x8x8xf32>
    %38 = arith.mulf %36, %37 : vector<2x8x8xf32>
    %39 = vector.shape_cast %9 : vector<2x8xf32> to vector<2x1x8xf32>
    %40 = vector.broadcast %39 : vector<2x1x8xf32> to vector<2x8x8xf32>
    %41 = arith.addf %38, %40 : vector<2x8x8xf32>
    %cst_17 = arith.constant dense<0xFF800000> : vector<2x8xf32>
    %42 = vector.multi_reduction <maximumf>, %41, %cst_17 [2] : vector<2x8x8xf32> to vector<2x8xf32>
    %43 = vector.shape_cast %42 : vector<2x8xf32> to vector<2x8x1xf32>
    %44 = vector.broadcast %43 : vector<2x8x1xf32> to vector<2x8x8xf32>
    %45 = arith.subf %41, %44 : vector<2x8x8xf32>
    %46 = math.exp %45 : vector<2x8x8xf32>
    %cst_18 = arith.constant dense<0.000000e+00> : vector<2x8xf32>
    %47 = vector.multi_reduction <add>, %46, %cst_18 [2] : vector<2x8x8xf32> to vector<2x8xf32>
    %48 = vector.shape_cast %47 : vector<2x8xf32> to vector<2x8x1xf32>
    %49 = vector.broadcast %48 : vector<2x8x1xf32> to vector<2x8x8xf32>
    %50 = arith.divf %46, %49 : vector<2x8x8xf32>
    "tpu.trace_start"() <{level = 10 : i32, message = "bqk,bkd->bqd"}> : () -> ()
    %cst_19 = arith.constant dense<0.000000e+00> : vector<2x8x16xf32>
    %51 = tpu.matmul %50, %35, %cst_19 {dimension_numbers = #tpu.dot_dimension_numbers<[2], [1], [1], [2], [0, 0, 0, 1, 1, 2], [0], [0]>} : vector<2x8x8xf32>, vector<2x8x16xf32>, vector<2x8x16xf32> -> vector<2x8x16xf32>
    "tpu.trace_stop"() : () -> ()
    %52 = vector.extract_strided_slice %28 {offsets = [0, 0, 16], sizes = [2, 8, 16], strides = [1, 1, 1]} : vector<2x8x32xf32> to vector<2x8x16xf32>
    %53 = vector.extract_strided_slice %30 {offsets = [0, 0, 16], sizes = [2, 8, 16], strides = [1, 1, 1]} : vector<2x8x32xf32> to vector<2x8x16xf32>
    %54 = vector.extract_strided_slice %32 {offsets = [0, 0, 16], sizes = [2, 8, 16], strides = [1, 1, 1]} : vector<2x8x32xf32> to vector<2x8x16xf32>
    "tpu.trace_start"() <{level = 10 : i32, message = "bqd,bkd->bqk"}> : () -> ()
    %cst_20 = arith.constant dense<0.000000e+00> : vector<2x8x8xf32>
    %55 = tpu.matmul %52, %53, %cst_20 {dimension_numbers = #tpu.dot_dimension_numbers<[2], [2], [1], [1], [0, 0, 0, 1, 1, 1], [0], [0]>} : vector<2x8x16xf32>, vector<2x8x16xf32>, vector<2x8x8xf32> -> vector<2x8x8xf32>
    "tpu.trace_stop"() : () -> ()
    %cst_21 = arith.constant 2.500000e-01 : f32
    %56 = vector.broadcast %cst_21 : f32 to vector<2x8x8xf32>
    %57 = arith.mulf %55, %56 : vector<2x8x8xf32>
    %58 = vector.shape_cast %9 : vector<2x8xf32> to vector<2x1x8xf32>
    %59 = vector.broadcast %58 : vector<2x1x8xf32> to vector<2x8x8xf32>
    %60 = arith.addf %57, %59 : vector<2x8x8xf32>
    %cst_22 = arith.constant dense<0xFF800000> : vector<2x8xf32>
    %61 = vector.multi_reduction <maximumf>, %60, %cst_22 [2] : vector<2x8x8xf32> to vector<2x8xf32>
    %62 = vector.shape_cast %61 : vector<2x8xf32> to vector<2x8x1xf32>
    %63 = vector.broadcast %62 : vector<2x8x1xf32> to vector<2x8x8xf32>
    %64 = arith.subf %60, %63 : vector<2x8x8xf32>
    %65 = math.exp %64 : vector<2x8x8xf32>
    %cst_23 = arith.constant dense<0.000000e+00> : vector<2x8xf32>
    %66 = vector.multi_reduction <add>, %65, %cst_23 [2] : vector<2x8x8xf32> to vector<2x8xf32>
    %67 = vector.shape_cast %66 : vector<2x8xf32> to vector<2x8x1xf32>
    %68 = vector.broadcast %67 : vector<2x8x1xf32> to vector<2x8x8xf32>
    %69 = arith.divf %65, %68 : vector<2x8x8xf32>
    "tpu.trace_start"() <{level = 10 : i32, message = "bqk,bkd->bqd"}> : () -> ()
    %cst_24 = arith.constant dense<0.000000e+00> : vector<2x8x16xf32>
    %70 = tpu.matmul %69, %54, %cst_24 {dimension_numbers = #tpu.dot_dimension_numbers<[2], [1], [1], [2], [0, 0, 0, 1, 1, 2], [0], [0]>} : vector<2x8x8xf32>, vector<2x8x16xf32>, vector<2x8x16xf32> -> vector<2x8x16xf32>
    "tpu.trace_stop"() : () -> ()
    %71 = tpu.concatenate %51, %70 in 2 : vector<2x8x16xf32>, vector<2x8x16xf32> -> vector<2x8x32xf32>
    %72 = vector.shape_cast %71 : vector<2x8x32xf32> to vector<16x32xf32>
    %73 = arith.truncf %72 : vector<16x32xf32> to vector<16x32xbf16>
    %74 = vector.extract_strided_slice %11 {offsets = [0, 96], sizes = [32, 32], strides = [1, 1]} : vector<32x192xbf16> to vector<32x32xbf16>
    %cst_25 = arith.constant dense<0.000000e+00> : vector<16x32xf32>
    %75 = tpu.matmul %73, %74, %cst_25 {dimension_numbers = #tpu.dot_dimension_numbers<[1], [0], [0], [1], [0, 0, 1, 1], [], []>} : vector<16x32xbf16>, vector<32x32xbf16>, vector<16x32xf32> -> vector<16x32xf32>
    %76 = vector.broadcast %15 : vector<1x32xf32> to vector<16x32xf32>
    %77 = arith.addf %75, %76 : vector<16x32xf32>
    %78 = arith.addf %77, %3 : vector<16x32xf32>
    %cst_26 = arith.constant dense<0.000000e+00> : vector<16xf32>
    %79 = vector.multi_reduction <add>, %78, %cst_26 [1] : vector<16x32xf32> to vector<16xf32>
    %80 = vector.shape_cast %79 : vector<16xf32> to vector<16x1xf32>
    %cst_27 = arith.constant 3.200000e+01 : f32
    %81 = vector.broadcast %cst_27 : f32 to vector<16x1xf32>
    %82 = arith.divf %80, %81 : vector<16x1xf32>
    %83 = vector.broadcast %82 : vector<16x1xf32> to vector<16x32xf32>
    %84 = arith.subf %78, %83 : vector<16x32xf32>
    %85 = arith.mulf %84, %84 : vector<16x32xf32>
    %cst_28 = arith.constant dense<0.000000e+00> : vector<16xf32>
    %86 = vector.multi_reduction <add>, %85, %cst_28 [1] : vector<16x32xf32> to vector<16xf32>
    %87 = vector.shape_cast %86 : vector<16xf32> to vector<16x1xf32>
    %cst_29 = arith.constant 3.200000e+01 : f32
    %88 = vector.broadcast %cst_29 : f32 to vector<16x1xf32>
    %89 = arith.divf %87, %88 : vector<16x1xf32>
    %90 = vector.broadcast %82 : vector<16x1xf32> to vector<16x32xf32>
    %91 = arith.subf %78, %90 : vector<16x32xf32>
    %cst_30 = arith.constant 9.99999996E-13 : f32
    %92 = vector.broadcast %cst_30 : f32 to vector<16x1xf32>
    %93 = arith.addf %89, %92 : vector<16x1xf32>
    %94 = math.rsqrt %93 : vector<16x1xf32>
    %95 = vector.broadcast %94 : vector<16x1xf32> to vector<16x32xf32>
    %96 = arith.mulf %91, %95 : vector<16x32xf32>
    %97 = vector.broadcast %16 : vector<1x32xf32> to vector<16x32xf32>
    %98 = arith.mulf %96, %97 : vector<16x32xf32>
    %99 = vector.broadcast %17 : vector<1x32xf32> to vector<16x32xf32>
    %100 = arith.addf %98, %99 : vector<16x32xf32>
    %101 = arith.truncf %100 : vector<16x32xf32> to vector<16x32xbf16>
    %102 = vector.extract_strided_slice %11 {offsets = [0, 128], sizes = [32, 64], strides = [1, 1]} : vector<32x192xbf16> to vector<32x64xbf16>
    %cst_31 = arith.constant dense<0.000000e+00> : vector<16x64xf32>
    %103 = tpu.matmul %101, %102, %cst_31 {dimension_numbers = #tpu.dot_dimension_numbers<[1], [0], [0], [1], [0, 0, 1, 1], [], []>} : vector<16x32xbf16>, vector<32x64xbf16>, vector<16x64xf32> -> vector<16x64xf32>
    %104 = vector.broadcast %18 : vector<1x64xf32> to vector<16x64xf32>
    %105 = arith.addf %103, %104 : vector<16x64xf32>
    %106 = arith.mulf %105, %105 : vector<16x64xf32>
    %107 = arith.mulf %105, %106 : vector<16x64xf32>
    %cst_32 = arith.constant 4.471500e-02 : f32
    %108 = vector.broadcast %cst_32 : f32 to vector<16x64xf32>
    %109 = arith.mulf %108, %107 : vector<16x64xf32>
    %110 = arith.addf %105, %109 : vector<16x64xf32>
    %cst_33 = arith.constant 0.797884583 : f32
    %111 = vector.broadcast %cst_33 : f32 to vector<16x64xf32>
    %112 = arith.mulf %111, %110 : vector<16x64xf32>
    %113 = math.tanh %112 : vector<16x64xf32>
    %cst_34 = arith.constant 1.000000e+00 : f32
    %114 = vector.broadcast %cst_34 : f32 to vector<16x64xf32>
    %115 = arith.addf %114, %113 : vector<16x64xf32>
    %cst_35 = arith.constant 5.000000e-01 : f32
    %116 = vector.broadcast %cst_35 : f32 to vector<16x64xf32>
    %117 = arith.mulf %116, %115 : vector<16x64xf32>
    %118 = arith.mulf %105, %117 : vector<16x64xf32>
    %119 = arith.truncf %118 : vector<16x64xf32> to vector<16x64xbf16>
    %c0_36 = arith.constant 0 : index
    %c0_37 = arith.constant 0 : index
    %c0_38 = arith.constant 0 : index
    %c0_39 = arith.constant 0 : index
    %120 = vector.load %arg10[%c0_36, %c0_37, %c0_38, %c0_39] : memref<1x1x64x32xbf16, #tpu.memory_space<vmem>>, vector<1x1x64x32xbf16>
    %121 = vector.shape_cast %120 : vector<1x1x64x32xbf16> to vector<64x32xbf16>
    %cst_40 = arith.constant dense<0.000000e+00> : vector<16x32xf32>
    %122 = tpu.matmul %119, %121, %cst_40 {dimension_numbers = #tpu.dot_dimension_numbers<[1], [0], [0], [1], [0, 0, 1, 1], [], []>} : vector<16x64xbf16>, vector<64x32xbf16>, vector<16x32xf32> -> vector<16x32xf32>
    %123 = vector.broadcast %19 : vector<1x32xf32> to vector<16x32xf32>
    %124 = arith.addf %122, %123 : vector<16x32xf32>
    %125 = arith.addf %124, %100 : vector<16x32xf32>
    %cst_41 = arith.constant dense<0.000000e+00> : vector<16xf32>
    %126 = vector.multi_reduction <add>, %125, %cst_41 [1] : vector<16x32xf32> to vector<16xf32>
    %127 = vector.shape_cast %126 : vector<16xf32> to vector<16x1xf32>
    %cst_42 = arith.constant 3.200000e+01 : f32
    %128 = vector.broadcast %cst_42 : f32 to vector<16x1xf32>
    %129 = arith.divf %127, %128 : vector<16x1xf32>
    %130 = vector.broadcast %129 : vector<16x1xf32> to vector<16x32xf32>
    %131 = arith.subf %125, %130 : vector<16x32xf32>
    %132 = arith.mulf %131, %131 : vector<16x32xf32>
    %cst_43 = arith.constant dense<0.000000e+00> : vector<16xf32>
    %133 = vector.multi_reduction <add>, %132, %cst_43 [1] : vector<16x32xf32> to vector<16xf32>
    %134 = vector.shape_cast %133 : vector<16xf32> to vector<16x1xf32>
    %cst_44 = arith.constant 3.200000e+01 : f32
    %135 = vector.broadcast %cst_44 : f32 to vector<16x1xf32>
    %136 = arith.divf %134, %135 : vector<16x1xf32>
    %137 = vector.broadcast %129 : vector<16x1xf32> to vector<16x32xf32>
    %138 = arith.subf %125, %137 : vector<16x32xf32>
    %cst_45 = arith.constant 9.99999996E-13 : f32
    %139 = vector.broadcast %cst_45 : f32 to vector<16x1xf32>
    %140 = arith.addf %136, %139 : vector<16x1xf32>
    %141 = math.rsqrt %140 : vector<16x1xf32>
    %142 = vector.broadcast %141 : vector<16x1xf32> to vector<16x32xf32>
    %143 = arith.mulf %138, %142 : vector<16x32xf32>
    %144 = vector.broadcast %20 : vector<1x32xf32> to vector<16x32xf32>
    %145 = arith.mulf %143, %144 : vector<16x32xf32>
    %146 = vector.broadcast %21 : vector<1x32xf32> to vector<16x32xf32>
    %147 = arith.addf %145, %146 : vector<16x32xf32>
    %c0_46 = arith.constant 0 : index
    %c0_47 = arith.constant 0 : index
    %148 = vector.load %arg12[%c0_46, %c0_47] : memref<16x32xf32, #tpu.memory_space<vmem>>, vector<16x32xf32>
    tpu.vector_store %arg12[%c0_46, %c0_47], %147 {strides = array<i32>} : memref<16x32xf32, #tpu.memory_space<vmem>>, vector<16x32xf32>,
    %c1_i32 = arith.constant 1 : i32
    %149 = arith.cmpi eq, %arg1, %c1_i32 : i32
    %150 = arith.extui %149 : i1 to i32
    %c0_i32_48 = arith.constant 0 : i32
    %151 = arith.cmpi ne, %150, %c0_i32_48 : i32
    scf.if %151 {
      %152 = vector.extract_strided_slice %147 {offsets = [0, 0], sizes = [1, 32], strides = [1, 1]} : vector<16x32xf32> to vector<1x32xf32>
      %153 = vector.extract_strided_slice %147 {offsets = [8, 0], sizes = [1, 32], strides = [1, 1]} : vector<16x32xf32> to vector<1x32xf32>
      %154 = tpu.concatenate %152, %153 in 0 : vector<1x32xf32>, vector<1x32xf32> -> vector<2x32xf32>
      %c0_49 = arith.constant 0 : index
      %c0_50 = arith.constant 0 : index
      %c0_51 = arith.constant 0 : index
      %155 = vector.load %arg11[%c0_49, %c0_50, %c0_51] : memref<1x2x32xf32, #tpu.memory_space<vmem>>, vector<1x2x32xf32>
      %156 = vector.shape_cast %155 : vector<1x2x32xf32> to vector<2x32xf32>
      %157 = vector.shape_cast %154 : vector<2x32xf32> to vector<1x2x32xf32>
      tpu.vector_store %arg11[%c0_49, %c0_50, %c0_51], %157 {strides = array<i32>} : memref<1x2x32xf32, #tpu.memory_space<vmem>>, vector<1x2x32xf32>,
    } else {
    }
    return
  }
  func.func @transform_0(%arg0: i32, %arg1: i32, %arg2: memref<2xi32, #tpu.memory_space<smem>>) -> (i32, i32, i32) {
    %c0_i32 = arith.constant 0 : i32
    %c0_i32_0 = arith.constant 0 : i32
    %c0_i32_1 = arith.constant 0 : i32
    return %arg0, %c0_i32, %c0_i32_0 : i32, i32, i32
  }
  func.func @transform_1(%arg0: i32, %arg1: i32, %arg2: memref<2xi32, #tpu.memory_space<smem>>) -> (i32, i32, i32) {
    %c0_i32 = arith.constant 0 : i32
    %c0_i32_0 = arith.constant 0 : i32
    %c0_i32_1 = arith.constant 0 : i32
    return %arg0, %c0_i32, %c0_i32_0 : i32, i32, i32
  }
  func.func @transform_2(%arg0: i32, %arg1: i32, %arg2: memref<2xi32, #tpu.memory_space<smem>>) -> (i32, i32, i32) {
    %0 = arith.index_cast %arg0 : i32 to index
    %1 = memref.load %arg2[%0] : memref<2xi32, #tpu.memory_space<smem>>
    %c0_i32 = arith.constant 0 : i32
    %c0_i32_0 = arith.constant 0 : i32
    %c0_i32_1 = arith.constant 0 : i32
    return %1, %c0_i32, %c0_i32_0 : i32, i32, i32
  }
  func.func @transform_3(%arg0: i32, %arg1: i32, %arg2: memref<2xi32, #tpu.memory_space<smem>>) -> (i32, i32, i32) {
    %0 = arith.index_cast %arg0 : i32 to index
    %1 = memref.load %arg2[%0] : memref<2xi32, #tpu.memory_space<smem>>
    %c0_i32 = arith.constant 0 : i32
    %c0_i32_0 = arith.constant 0 : i32
    %c0_i32_1 = arith.constant 0 : i32
    return %1, %c0_i32, %c0_i32_0 : i32, i32, i32
  }
  func.func @transform_4(%arg0: i32, %arg1: i32, %arg2: memref<2xi32, #tpu.memory_space<smem>>) -> (i32, i32, i32) {
    %0 = arith.index_cast %arg0 : i32 to index
    %1 = memref.load %arg2[%0] : memref<2xi32, #tpu.memory_space<smem>>
    %c0_i32 = arith.constant 0 : i32
    %c0_i32_0 = arith.constant 0 : i32
    %c0_i32_1 = arith.constant 0 : i32
    return %1, %c0_i32, %c0_i32_0 : i32, i32, i32
  }
  func.func @transform_5(%arg0: i32, %arg1: i32, %arg2: memref<2xi32, #tpu.memory_space<smem>>) -> (i32, i32, i32, i32) {
    %0 = arith.index_cast %arg0 : i32 to index
    %1 = memref.load %arg2[%0] : memref<2xi32, #tpu.memory_space<smem>>
    %c0_i32 = arith.constant 0 : i32
    %c0_i32_0 = arith.constant 0 : i32
    %c0_i32_1 = arith.constant 0 : i32
    return %1, %arg1, %c0_i32, %c0_i32_0 : i32, i32, i32, i32
  }
  func.func @transform_6(%arg0: i32, %arg1: i32, %arg2: memref<2xi32, #tpu.memory_space<smem>>) -> (i32, i32, i32, i32) {
    %0 = arith.index_cast %arg0 : i32 to index
    %1 = memref.load %arg2[%0] : memref<2xi32, #tpu.memory_space<smem>>
    %c0_i32 = arith.constant 0 : i32
    %c0_i32_0 = arith.constant 0 : i32
    %c0_i32_1 = arith.constant 0 : i32
    return %1, %arg1, %c0_i32, %c0_i32_0 : i32, i32, i32, i32
  }
  func.func @transform_7(%arg0: i32, %arg1: i32, %arg2: memref<2xi32, #tpu.memory_space<smem>>) -> (i32, i32, i32, i32) {
    %0 = arith.index_cast %arg0 : i32 to index
    %1 = memref.load %arg2[%0] : memref<2xi32, #tpu.memory_space<smem>>
    %c0_i32 = arith.constant 0 : i32
    %c0_i32_0 = arith.constant 0 : i32
    %c0_i32_1 = arith.constant 0 : i32
    return %1, %arg1, %c0_i32, %c0_i32_0 : i32, i32, i32, i32
  }
  func.func @transform_8(%arg0: i32, %arg1: i32, %arg2: memref<2xi32, #tpu.memory_space<smem>>) -> (i32, i32, i32) {
    %c0_i32 = arith.constant 0 : i32
    %c0_i32_0 = arith.constant 0 : i32
    %c0_i32_1 = arith.constant 0 : i32
    return %arg0, %c0_i32, %c0_i32_0 : i32, i32, i32
  }
}

</mosaic_0001>

<llo_original>
// kernel: bibert_embs.1
$region0: #{bibert_embs.1}
  #allocation0 [shape = 'u32[]', space=smem, size = 0x4, offset = 0x4, fixed_abs, tag = 'smem constant byte address 0x4 - core index']
  #allocation1 [shape = 'u32[144,128]{1,0:T(1,128)}', space=vmem, size = 0x12000, scoped, tag = 'internal scratch']
  #allocation2 [shape = 'f32[16,32]{1,0:T(8,128)}', space=vmem, size = 0x2000, scoped, tag = 'scratch operand']
  #allocation3 [shape = 's32[1]{0}', space=sflag, size = 0x4, scoped, tag = 'scoped memory for bibert_embs.1']
  #allocation4 [shape = 'u8[512]{0}', space=smem, size = 0x200, scoped, tag = 'prefetched SMEM operand 0']
  %s0 = inlined_call_operand.vmem [shape: s32[2], index: 0, kind: input, shape index: {}]
  %s1 = inlined_call_operand.vmem [shape: s32[2,16,1], index: 1, kind: input, shape index: {}]
  %s2 = inlined_call_operand.vmem [shape: f32[2,2,8], index: 2, kind: input, shape index: {}]
  %s3 = inlined_call_operand.vmem [shape: f32[2,128,32], index: 3, kind: input, shape index: {}]
  %s4 = inlined_call_operand.vmem [shape: f32[2,8,32], index: 4, kind: input, shape index: {}]
  %s5 = inlined_call_operand.vmem [shape: f32[2,3,32], index: 5, kind: input, shape index: {}]
  %s6 = inlined_call_operand.vmem [shape: f32[2,2,8,96], index: 6, kind: input, shape index: {}]
  %s7 = inlined_call_operand.vmem [shape: bf16[2,2,32,192], index: 7, kind: input, shape index: {}]
  %s8 = inlined_call_operand.vmem [shape: bf16[2,2,64,32], index: 8, kind: input, shape index: {}]
  %s9 = inlined_call_operand.vmem [shape: f32[2,2,32], index: 9, kind: output, shape index: {}]
  %s10 = sld [smem:[#allocation0]]
  $region73: #{bibert_embs.1} parent=0
    _
  %s12 = ssub.s32 1, %s10
  %s13 = scalar_select 0, %s12, %s10
  %s14 = sshll.u32 %s0, 4
  %s15 = int_to_ptr.vmem [resolvable:$true] %s14
  %17 = dma.vmem_to_smem %s15, 16, [#allocation4], [#allocation3]
  %18 = dma.done [#allocation3], 16
  %19 = sfence
  loop: start=0, step=1, limit=6
  $region2: #{bibert_embs.1} parent=0 // loop_pre_header
    _
  $region3: #{bibert_embs.1} parent=0 // loop_header
    %s21 = sphi 0, %s25
    %p22 = scmp.ge.s32.totalorder %s21, 6
    %s28 = sphi 0, %s40
    %s29 = sphi 0, %s36
    %s30 = sphi 0, %s28
    %s31 = sphi 0, %s29
    %s32 = sphi 0, %s30
    %s33 = sphi 0, %s31
    %s43 = sphi 0, %s45
    %s46 = sphi 0, %s43
    %s47 = sphi 0, %s46
    %s63 = sphi 0, %s47
    %s69 = sphi 0, %s71
    %s72 = sphi 0, %s69
    %s73 = sphi 0, %s72
    %s89 = sphi 0, %s73
    %s97 = sphi 0, %s99
    %s100 = sphi 0, %s97
    %s101 = sphi 0, %s100
    %s117 = sphi 0, %s101
    %s125 = sphi 0, %s127
    %s128 = sphi 0, %s125
    %s129 = sphi 0, %s128
    %s145 = sphi 0, %s129
    %s153 = sphi 0, %s155
    %s156 = sphi 0, %s153
    %s157 = sphi 0, %s156
    %s173 = sphi 0, %s157
    %s183 = sphi 0, %s185
    %s186 = sphi 0, %s183
    %s187 = sphi 0, %s186
    %s203 = sphi 0, %s187
    %s213 = sphi 0, %s215
    %s216 = sphi 0, %s213
    %s217 = sphi 0, %s216
    %s233 = sphi 0, %s217
    %s243 = sphi 0, %s245
    %s246 = sphi 0, %s243
    %s247 = sphi 0, %s246
    %s263 = sphi 0, %s247
    %s269 = sphi 0, %s271
    %s272 = sphi 0, %s269
    %s273 = sphi 0, %s272
    %s289 = sphi 0, %s273
  $region4: #{bibert_embs.1} parent=0 // loop_header_branch
    %24 = sbr.rel (%p22) target = $region8
  $region5: #{bibert_embs.1} parent=0 // loop_body
    %s26 = ssub.s32 %s21, 1
    %s27 = ssub.s32 %s21, 2
    %s34 = sadd.s32 1, %s29
    %p35 = scmp.ge.s32.totalorder %s34, 2
    %s36 = scalar_select %p35, 0, %s34
    %s37 = sadd.s32 1, %s28
    %s38 = scalar_select %p35, %s37, %s28
    %p39 = scmp.ge.s32.totalorder %s38, 2
    %s40 = scalar_select %p39, 0, %s38
    %s41 = ssub.s32 %s28, %s40
    %p42 = scmp.eq.s32.totalorder %s41, 0
    %s44 = sadd.s32 %s43, 1
    %s45 = scalar_select %p42, %s43, %s44
    %p48 = pneg %p42
    %p49 = scmp.eq.s32.totalorder %s21, 3
    %p50 = por %p48, %p49
    %p51 = scmp.ne.s32.totalorder %s43, %s46
    %p52 = scmp.eq.s32.totalorder %s21, 0
    %p53 = por %p51, %p52
    %p54 = scmp.ne.s32.totalorder %s43, %s46
    %p55 = scmp.eq.s32.totalorder %s26, 3
    %p56 = por %p54, %p55
    %p57 = scmp.ne.s32.totalorder %s46, %s47
    %p58 = scmp.eq.s32.totalorder %s26, 0
    %p59 = por %p57, %p58
    %p60 = scmp.ne.s32.totalorder %s46, %s47
    %p61 = scmp.eq.s32.totalorder %s27, 3
    %p62 = por %p60, %p61
    %p64 = scmp.ne.s32.totalorder %s47, %s63
    %p65 = scmp.eq.s32.totalorder %s27, 0
    %p66 = por %p64, %p65
    %s67 = ssub.s32 %s28, %s40
    %p68 = scmp.eq.s32.totalorder %s67, 0
    %s70 = sadd.s32 %s69, 1
    %s71 = scalar_select %p68, %s69, %s70
    %p74 = pneg %p68
    %p75 = scmp.eq.s32.totalorder %s21, 3
    %p76 = por %p74, %p75
    %p77 = scmp.ne.s32.totalorder %s69, %s72
    %p78 = scmp.eq.s32.totalorder %s21, 0
    %p79 = por %p77, %p78
    %p80 = scmp.ne.s32.totalorder %s69, %s72
    %p81 = scmp.eq.s32.totalorder %s26, 3
    %p82 = por %p80, %p81
    %p83 = scmp.ne.s32.totalorder %s72, %s73
    %p84 = scmp.eq.s32.totalorder %s26, 0
    %p85 = por %p83, %p84
    %p86 = scmp.ne.s32.totalorder %s72, %s73
    %p87 = scmp.eq.s32.totalorder %s27, 3
    %p88 = por %p86, %p87
    %p90 = scmp.ne.s32.totalorder %s73, %s89
    %p91 = scmp.eq.s32.totalorder %s27, 0
    %p92 = por %p90, %p91
    %s93 = sld [smem:[#allocation4 + %s28]]
    %s94 = sld [smem:[#allocation4 + %s40]]
    %s95 = ssub.s32 %s93, %s94
    %p96 = scmp.eq.s32.totalorder %s95, 0
    %s98 = sadd.s32 %s97, 1
    %s99 = scalar_select %p96, %s97, %s98
    %p102 = pneg %p96
    %p103 = scmp.eq.s32.totalorder %s21, 3
    %p104 = por %p102, %p103
    %p105 = scmp.ne.s32.totalorder %s97, %s100
    %p106 = scmp.eq.s32.totalorder %s21, 0
    %p107 = por %p105, %p106
    %p108 = scmp.ne.s32.totalorder %s97, %s100
    %p109 = scmp.eq.s32.totalorder %s26, 3
    %p110 = por %p108, %p109
    %p111 = scmp.ne.s32.totalorder %s100, %s101
    %p112 = scmp.eq.s32.totalorder %s26, 0
    %p113 = por %p111, %p112
    %p114 = scmp.ne.s32.totalorder %s100, %s101
    %p115 = scmp.eq.s32.totalorder %s27, 3
    %p116 = por %p114, %p115
    %p118 = scmp.ne.s32.totalorder %s101, %s117
    %p119 = scmp.eq.s32.totalorder %s27, 0
    %p120 = por %p118, %p119
    %s121 = sld [smem:[#allocation4 + %s28]]
    %s122 = sld [smem:[#allocation4 + %s40]]
    %s123 = ssub.s32 %s121, %s122
    %p124 = scmp.eq.s32.totalorder %s123, 0
    %s126 = sadd.s32 %s125, 1
    %s127 = scalar_select %p124, %s125, %s126
    %p130 = pneg %p124
    %p131 = scmp.eq.s32.totalorder %s21, 3
    %p132 = por %p130, %p131
    %p133 = scmp.ne.s32.totalorder %s125, %s128
    %p134 = scmp.eq.s32.totalorder %s21, 0
    %p135 = por %p133, %p134
    %p136 = scmp.ne.s32.totalorder %s125, %s128
    %p137 = scmp.eq.s32.totalorder %s26, 3
    %p138 = por %p136, %p137
    %p139 = scmp.ne.s32.totalorder %s128, %s129
    %p140 = scmp.eq.s32.totalorder %s26, 0
    %p141 = por %p139, %p140
    %p142 = scmp.ne.s32.totalorder %s128, %s129
    %p143 = scmp.eq.s32.totalorder %s27, 3
    %p144 = por %p142, %p143
    %p146 = scmp.ne.s32.totalorder %s129, %s145
    %p147 = scmp.eq.s32.totalorder %s27, 0
    %p148 = por %p146, %p147
    %s149 = sld [smem:[#allocation4 + %s28]]
    %s150 = sld [smem:[#allocation4 + %s40]]
    %s151 = ssub.s32 %s149, %s150
    %p152 = scmp.eq.s32.totalorder %s151, 0
    %s154 = sadd.s32 %s153, 1
    %s155 = scalar_select %p152, %s153, %s154
    %p158 = pneg %p152
    %p159 = scmp.eq.s32.totalorder %s21, 3
    %p160 = por %p158, %p159
    %p161 = scmp.ne.s32.totalorder %s153, %s156
    %p162 = scmp.eq.s32.totalorder %s21, 0
    %p163 = por %p161, %p162
    %p164 = scmp.ne.s32.totalorder %s153, %s156
    %p165 = scmp.eq.s32.totalorder %s26, 3
    %p166 = por %p164, %p165
    %p167 = scmp.ne.s32.totalorder %s156, %s157
    %p168 = scmp.eq.s32.totalorder %s26, 0
    %p169 = por %p167, %p168
    %p170 = scmp.ne.s32.totalorder %s156, %s157
    %p171 = scmp.eq.s32.totalorder %s27, 3
    %p172 = por %p170, %p171
    %p174 = scmp.ne.s32.totalorder %s157, %s173
    %p175 = scmp.eq.s32.totalorder %s27, 0
    %p176 = por %p174, %p175
    %s177 = sld [smem:[#allocation4 + %s28]]
    %s178 = sld [smem:[#allocation4 + %s40]]
    %s179 = ssub.s32 %s177, %s178
    %s180 = ssub.s32 %s29, %s36
    %s181 = sor.u32 %s179, %s180
    %p182 = scmp.eq.s32.totalorder %s181, 0
    %s184 = sadd.s32 %s183, 1
    %s185 = scalar_select %p182, %s183, %s184
    %p188 = pneg %p182
    %p189 = scmp.eq.s32.totalorder %s21, 3
    %p190 = por %p188, %p189
    %p191 = scmp.ne.s32.totalorder %s183, %s186
    %p192 = scmp.eq.s32.totalorder %s21, 0
    %p193 = por %p191, %p192
    %p194 = scmp.ne.s32.totalorder %s183, %s186
    %p195 = scmp.eq.s32.totalorder %s26, 3
    %p196 = por %p194, %p195
    %p197 = scmp.ne.s32.totalorder %s186, %s187
    %p198 = scmp.eq.s32.totalorder %s26, 0
    %p199 = por %p197, %p198
    %p200 = scmp.ne.s32.totalorder %s186, %s187
    %p201 = scmp.eq.s32.totalorder %s27, 3
    %p202 = por %p200, %p201
    %p204 = scmp.ne.s32.totalorder %s187, %s203
    %p205 = scmp.eq.s32.totalorder %s27, 0
    %p206 = por %p204, %p205
    %s207 = sld [smem:[#allocation4 + %s28]]
    %s208 = sld [smem:[#allocation4 + %s40]]
    %s209 = ssub.s32 %s207, %s208
    %s210 = ssub.s32 %s29, %s36
    %s211 = sor.u32 %s209, %s210
    %p212 = scmp.eq.s32.totalorder %s211, 0
    %s214 = sadd.s32 %s213, 1
    %s215 = scalar_select %p212, %s213, %s214
    %p218 = pneg %p212
    %p219 = scmp.eq.s32.totalorder %s21, 3
    %p220 = por %p218, %p219
    %p221 = scmp.ne.s32.totalorder %s213, %s216
    %p222 = scmp.eq.s32.totalorder %s21, 0
    %p223 = por %p221, %p222
    %p224 = scmp.ne.s32.totalorder %s213, %s216
    %p225 = scmp.eq.s32.totalorder %s26, 3
    %p226 = por %p224, %p225
    %p227 = scmp.ne.s32.totalorder %s216, %s217
    %p228 = scmp.eq.s32.totalorder %s26, 0
    %p229 = por %p227, %p228
    %p230 = scmp.ne.s32.totalorder %s216, %s217
    %p231 = scmp.eq.s32.totalorder %s27, 3
    %p232 = por %p230, %p231
    %p234 = scmp.ne.s32.totalorder %s217, %s233
    %p235 = scmp.eq.s32.totalorder %s27, 0
    %p236 = por %p234, %p235
    %s237 = sld [smem:[#allocation4 + %s28]]
    %s238 = sld [smem:[#allocation4 + %s40]]
    %s239 = ssub.s32 %s237, %s238
    %s240 = ssub.s32 %s29, %s36
    %s241 = sor.u32 %s239, %s240
    %p242 = scmp.eq.s32.totalorder %s241, 0
    %s244 = sadd.s32 %s243, 1
    %s245 = scalar_select %p242, %s243, %s244
    %p248 = pneg %p242
    %p249 = scmp.eq.s32.totalorder %s21, 3
    %p250 = por %p248, %p249
    %p251 = scmp.ne.s32.totalorder %s243, %s246
    %p252 = scmp.eq.s32.totalorder %s21, 0
    %p253 = por %p251, %p252
    %p254 = scmp.ne.s32.totalorder %s243, %s246
    %p255 = scmp.eq.s32.totalorder %s26, 3
    %p256 = por %p254, %p255
    %p257 = scmp.ne.s32.totalorder %s246, %s247
    %p258 = scmp.eq.s32.totalorder %s26, 0
    %p259 = por %p257, %p258
    %p260 = scmp.ne.s32.totalorder %s246, %s247
    %p261 = scmp.eq.s32.totalorder %s27, 3
    %p262 = por %p260, %p261
    %p264 = scmp.ne.s32.totalorder %s247, %s263
    %p265 = scmp.eq.s32.totalorder %s27, 0
    %p266 = por %p264, %p265
    %s267 = ssub.s32 %s28, %s40
    %p268 = scmp.eq.s32.totalorder %s267, 0
    %s270 = sadd.s32 %s269, 1
    %s271 = scalar_select %p268, %s269, %s270
    %p274 = pneg %p268
    %p275 = scmp.eq.s32.totalorder %s21, 3
    %p276 = por %p274, %p275
    %p277 = scmp.ne.s32.totalorder %s269, %s272
    %p278 = scmp.eq.s32.totalorder %s21, 0
    %p279 = por %p277, %p278
    %p280 = scmp.ne.s32.totalorder %s269, %s272
    %p281 = scmp.eq.s32.totalorder %s26, 3
    %p282 = por %p280, %p281
    %p283 = scmp.ne.s32.totalorder %s272, %s273
    %p284 = scmp.eq.s32.totalorder %s26, 0
    %p285 = por %p283, %p284
    %p286 = scmp.ne.s32.totalorder %s272, %s273
    %p287 = scmp.eq.s32.totalorder %s27, 3
    %p288 = por %p286, %p287
    %p290 = scmp.ne.s32.totalorder %s273, %s289
    %p291 = scmp.eq.s32.totalorder %s27, 0
    %p292 = por %p290, %p291
    %p293 = scmp.le.s32.totalorder 1, %s21
    %p294 = scmp.lt.s32.totalorder %s21, 5
    %p295 = pnand %p293, %p294
    %p296 = pneg %p295
    // Predicated region
    $region9: #{bibert_embs.1} parent=5 // pred_check
      _
    $region10: #{bibert_embs.1} parent=5 // pred_check_branch
      %298 = sbr.rel (%p295) target = $region12
    $region11: #{bibert_embs.1} parent=5 // pred_region
      %s299 = ssub.s32 %s21, 1
    $region12: #{bibert_embs.1} parent=5 // pred_fallthru
      _
    %p300 = scmp.lt.s32.totalorder %s21, 4
    // Predicated region
    $region13: #{bibert_embs.1} parent=5 // pred_check
      %p301 = pneg %p300
    $region14: #{bibert_embs.1} parent=5 // pred_check_branch
      %303 = sbr.rel (%p301) target = $region16
    $region15: #{bibert_embs.1} parent=5 // pred_region
      // Predicated region
      $region17: #{bibert_embs.1} parent=15 // pred_check
        %p304 = pneg %p53
      $region18: #{bibert_embs.1} parent=15 // pred_check_branch
        %306 = sbr.rel (%p304) target = $region20
      $region19: #{bibert_embs.1} parent=15 // pred_region
        %p307 = scmp.lt.s32.totalorder %s28, 1
        %s308 = scalar_select %p307, %s28, 1
        %s309 = smul.addr %s308, 2
        %s310 = smul.addr %s309, 8
        %s311 = scalar_lea.vmem %s1, %s310
      $region20: #{bibert_embs.1} parent=15 // pred_fallthru
        _
      // Predicated region
      $region21: #{bibert_embs.1} parent=15 // pred_check
        %p312 = pneg %p79
      $region22: #{bibert_embs.1} parent=15 // pred_check_branch
        %314 = sbr.rel (%p312) target = $region24
      $region23: #{bibert_embs.1} parent=15 // pred_region
        %p315 = scmp.lt.s32.totalorder %s28, 1
        %s316 = scalar_select %p315, %s28, 1
        %s317 = smul.addr %s316, 2
        %s318 = scalar_lea.vmem %s2, %s317
      $region24: #{bibert_embs.1} parent=15 // pred_fallthru
        _
      // Predicated region
      $region25: #{bibert_embs.1} parent=15 // pred_check
        %p319 = pneg %p107
      $region26: #{bibert_embs.1} parent=15 // pred_check_branch
        %321 = sbr.rel (%p319) target = $region28
      $region27: #{bibert_embs.1} parent=15 // pred_region
        %s322 = sld [smem:[#allocation4 + %s28]]
        %p323 = scmp.lt.s32.totalorder %s322, 1
        %s324 = scalar_select %p323, %s322, 1
        %s325 = smul.addr %s324, 16
        %s326 = smul.addr %s325, 8
        %s327 = scalar_lea.vmem %s3, %s326
        %s328 = sld [smem:[#allocation4 + %s28]]
      $region28: #{bibert_embs.1} parent=15 // pred_fallthru
        _
      // Predicated region
      $region29: #{bibert_embs.1} parent=15 // pred_check
        %p329 = pneg %p135
      $region30: #{bibert_embs.1} parent=15 // pred_check_branch
        %331 = sbr.rel (%p329) target = $region32
      $region31: #{bibert_embs.1} parent=15 // pred_region
        %s332 = sld [smem:[#allocation4 + %s28]]
        %p333 = scmp.lt.s32.totalorder %s332, 1
        %s334 = scalar_select %p333, %s332, 1
        %s335 = smul.addr %s334, 8
        %s336 = scalar_lea.vmem %s4, %s335
        %s337 = sld [smem:[#allocation4 + %s28]]
      $region32: #{bibert_embs.1} parent=15 // pred_fallthru
        _
      // Predicated region
      $region33: #{bibert_embs.1} parent=15 // pred_check
        %p338 = pneg %p163
      $region34: #{bibert_embs.1} parent=15 // pred_check_branch
        %340 = sbr.rel (%p338) target = $region36
      $region35: #{bibert_embs.1} parent=15 // pred_region
        %s341 = sld [smem:[#allocation4 + %s28]]
        %p342 = scmp.lt.s32.totalorder %s341, 1
        %s343 = scalar_select %p342, %s341, 1
        %s344 = smul.addr %s343, 4
        %s345 = scalar_lea.vmem %s5, %s344
        %s346 = sld [smem:[#allocation4 + %s28]]
      $region36: #{bibert_embs.1} parent=15 // pred_fallthru
        _
      // Predicated region
      $region37: #{bibert_embs.1} parent=15 // pred_check
        %p347 = pneg %p193
      $region38: #{bibert_embs.1} parent=15 // pred_check_branch
        %349 = sbr.rel (%p347) target = $region40
      $region39: #{bibert_embs.1} parent=15 // pred_region
        %s350 = sld [smem:[#allocation4 + %s28]]
        %p351 = scmp.lt.s32.totalorder %s350, 1
        %s352 = scalar_select %p351, %s350, 1
        %p353 = scmp.lt.s32.totalorder %s29, 1
        %s354 = scalar_select %p353, %s29, 1
        %s355 = smul.addr %s352, 2
        %s356 = sadd.s32 %s354, %s355
        %s357 = smul.addr %s356, 8
        %s358 = scalar_lea.vmem %s6, %s357
        %s359 = sld [smem:[#allocation4 + %s28]]
      $region40: #{bibert_embs.1} parent=15 // pred_fallthru
        _
      // Predicated region
      $region41: #{bibert_embs.1} parent=15 // pred_check
        %p360 = pneg %p223
      $region42: #{bibert_embs.1} parent=15 // pred_check_branch
        %362 = sbr.rel (%p360) target = $region44
      $region43: #{bibert_embs.1} parent=15 // pred_region
        %s363 = sld [smem:[#allocation4 + %s28]]
        %p364 = scmp.lt.s32.totalorder %s363, 1
        %s365 = scalar_select %p364, %s363, 1
        %p366 = scmp.lt.s32.totalorder %s29, 1
        %s367 = scalar_select %p366, %s29, 1
        %s368 = smul.addr %s367, 8
        %s369 = smul.addr %s365, 16
        %s370 = sadd.s32 %s368, %s369
        %s371 = smul.addr %s370, 4
        %s372 = scalar_lea.vmem %s7, %s371
        %s373 = sld [smem:[#allocation4 + %s28]]
      $region44: #{bibert_embs.1} parent=15 // pred_fallthru
        _
      // Predicated region
      $region45: #{bibert_embs.1} parent=15 // pred_check
        %p374 = pneg %p253
      $region46: #{bibert_embs.1} parent=15 // pred_check_branch
        %376 = sbr.rel (%p374) target = $region48
      $region47: #{bibert_embs.1} parent=15 // pred_region
        %s377 = sld [smem:[#allocation4 + %s28]]
        %p378 = scmp.lt.s32.totalorder %s377, 1
        %s379 = scalar_select %p378, %s377, 1
        %p380 = scmp.lt.s32.totalorder %s29, 1
        %s381 = scalar_select %p380, %s29, 1
        %s382 = smul.addr %s381, 8
        %s383 = smul.addr %s379, 16
        %s384 = sadd.s32 %s382, %s383
        %s385 = smul.addr %s384, 4
        %s386 = scalar_lea.vmem %s8, %s385
        %s387 = sld [smem:[#allocation4 + %s28]]
      $region48: #{bibert_embs.1} parent=15 // pred_fallthru
        _
    $region16: #{bibert_embs.1} parent=5 // pred_fallthru
      _
    %p388 = scmp.le.s32.totalorder 1, %s21
    %p389 = scmp.lt.s32.totalorder %s21, 5
    %p390 = pnand %p388, %p389
    %p391 = pneg %p390
    // Predicated region
    $region49: #{bibert_embs.1} parent=5 // pred_check
      _
    $region50: #{bibert_embs.1} parent=5 // pred_check_branch
      %393 = sbr.rel (%p390) target = $region52
    $region51: #{bibert_embs.1} parent=5 // pred_region
      %s394 = ssub.s32 %s21, 1
      %p395 = scmp.lt.s32.totalorder %s30, 1
      %s396 = scalar_select %p395, %s30, 1
      %s397 = smul.addr %s396, 2
      %s398 = smul.addr %s397, 8
      %s399 = scalar_lea.vmem %s1, %s398
      %p400 = pneg %p59
      %p401 = pneg %p56
      %p402 = scmp.lt.s32.totalorder %s30, 1
      %s403 = scalar_select %p402, %s30, 1
      %s404 = smul.addr %s403, 2
      %s405 = scalar_lea.vmem %s2, %s404
      %p406 = pneg %p85
      %p407 = pneg %p82
      %s408 = sld [smem:[#allocation4 + %s30]]
      %p409 = scmp.lt.s32.totalorder %s408, 1
      %s410 = scalar_select %p409, %s408, 1
      %s411 = smul.addr %s410, 16
      %s412 = smul.addr %s411, 8
      %s413 = scalar_lea.vmem %s3, %s412
      %p414 = pneg %p113
      %p415 = pneg %p110
      %s416 = sld [smem:[#allocation4 + %s30]]
      %p417 = scmp.lt.s32.totalorder %s416, 1
      %s418 = scalar_select %p417, %s416, 1
      %s419 = smul.addr %s418, 8
      %s420 = scalar_lea.vmem %s4, %s419
      %p421 = pneg %p141
      %p422 = pneg %p138
      %s423 = sld [smem:[#allocation4 + %s30]]
      %p424 = scmp.lt.s32.totalorder %s423, 1
      %s425 = scalar_select %p424, %s423, 1
      %s426 = smul.addr %s425, 4
      %s427 = scalar_lea.vmem %s5, %s426
      %p428 = pneg %p169
      %p429 = pneg %p166
      %s430 = sld [smem:[#allocation4 + %s30]]
      %p431 = scmp.lt.s32.totalorder %s430, 1
      %s432 = scalar_select %p431, %s430, 1
      %p433 = scmp.lt.s32.totalorder %s31, 1
      %s434 = scalar_select %p433, %s31, 1
      %s435 = smul.addr %s432, 2
      %s436 = sadd.s32 %s434, %s435
      %s437 = smul.addr %s436, 8
      %s438 = scalar_lea.vmem %s6, %s437
      %p439 = pneg %p199
      %p440 = pneg %p196
      %s441 = sld [smem:[#allocation4 + %s30]]
      %p442 = scmp.lt.s32.totalorder %s441, 1
      %s443 = scalar_select %p442, %s441, 1
      %p444 = scmp.lt.s32.totalorder %s31, 1
      %s445 = scalar_select %p444, %s31, 1
      %s446 = smul.addr %s445, 8
      %s447 = smul.addr %s443, 16
      %s448 = sadd.s32 %s446, %s447
      %s449 = smul.addr %s448, 4
      %s450 = scalar_lea.vmem %s7, %s449
      %p451 = pneg %p229
      %p452 = pneg %p226
      %s453 = sld [smem:[#allocation4 + %s30]]
      %p454 = scmp.lt.s32.totalorder %s453, 1
      %s455 = scalar_select %p454, %s453, 1
      %p456 = scmp.lt.s32.totalorder %s31, 1
      %s457 = scalar_select %p456, %s31, 1
      %s458 = smul.addr %s457, 8
      %s459 = smul.addr %s455, 16
      %s460 = sadd.s32 %s458, %s459
      %s461 = smul.addr %s460, 4
      %s462 = scalar_lea.vmem %s8, %s461
      %p463 = pneg %p259
      %p464 = pneg %p256
      %p465 = pneg %p285
      %p466 = pneg %p282
      %p467 = scmp.lt.s32.totalorder %s30, 1
      %s468 = scalar_select %p467, %s30, 1
      %s469 = smul.addr %s468, 2
      %s470 = scalar_lea.vmem %s9, %s469
      %p471 = scmp.lt.s32.totalorder %s30, 1
      %s472 = scalar_select %p471, %s30, 1
      %s473 = smul.addr %s472, 2
      %s474 = smul.addr %s473, 8
      %s475 = scalar_lea.vmem %s1, %s474
      %p476 = scmp.lt.s32.totalorder %s30, 1
      %s477 = scalar_select %p476, %s30, 1
      %s478 = smul.addr %s477, 2
      %s479 = scalar_lea.vmem %s2, %s478
      %s480 = sld [smem:[#allocation4 + %s30]]
      %p481 = scmp.lt.s32.totalorder %s480, 1
      %s482 = scalar_select %p481, %s480, 1
      %s483 = smul.addr %s482, 16
      %s484 = smul.addr %s483, 8
      %s485 = scalar_lea.vmem %s3, %s484
      %s486 = sld [smem:[#allocation4 + %s30]]
      %s487 = sld [smem:[#allocation4 + %s30]]
      %p488 = scmp.lt.s32.totalorder %s487, 1
      %s489 = scalar_select %p488, %s487, 1
      %s490 = smul.addr %s489, 8
      %s491 = scalar_lea.vmem %s4, %s490
      %s492 = sld [smem:[#allocation4 + %s30]]
      %s493 = sld [smem:[#allocation4 + %s30]]
      %p494 = scmp.lt.s32.totalorder %s493, 1
      %s495 = scalar_select %p494, %s493, 1
      %s496 = smul.addr %s495, 4
      %s497 = scalar_lea.vmem %s5, %s496
      %s498 = sld [smem:[#allocation4 + %s30]]
      %s499 = sld [smem:[#allocation4 + %s30]]
      %p500 = scmp.lt.s32.totalorder %s499, 1
      %s501 = scalar_select %p500, %s499, 1
      %p502 = scmp.lt.s32.totalorder %s31, 1
      %s503 = scalar_select %p502, %s31, 1
      %s504 = smul.addr %s501, 2
      %s505 = sadd.s32 %s503, %s504
      %s506 = smul.addr %s505, 8
      %s507 = scalar_lea.vmem %s6, %s506
      %s508 = sld [smem:[#allocation4 + %s30]]
      %s509 = sld [smem:[#allocation4 + %s30]]
      %p510 = scmp.lt.s32.totalorder %s509, 1
      %s511 = scalar_select %p510, %s509, 1
      %p512 = scmp.lt.s32.totalorder %s31, 1
      %s513 = scalar_select %p512, %s31, 1
      %s514 = smul.addr %s513, 8
      %s515 = smul.addr %s511, 16
      %s516 = sadd.s32 %s514, %s515
      %s517 = smul.addr %s516, 4
      %s518 = scalar_lea.vmem %s7, %s517
      %s519 = sld [smem:[#allocation4 + %s30]]
      %s520 = sld [smem:[#allocation4 + %s30]]
      %p521 = scmp.lt.s32.totalorder %s520, 1
      %s522 = scalar_select %p521, %s520, 1
      %p523 = scmp.lt.s32.totalorder %s31, 1
      %s524 = scalar_select %p523, %s31, 1
      %s525 = smul.addr %s524, 8
      %s526 = smul.addr %s522, 16
      %s527 = sadd.s32 %s525, %s526
      %s528 = smul.addr %s527, 4
      %s529 = scalar_lea.vmem %s8, %s528
      %s530 = sld [smem:[#allocation4 + %s30]]
      %p531 = scmp.lt.s32.totalorder %s30, 1
      %s532 = scalar_select %p531, %s30, 1
      %s533 = smul.addr %s532, 2
      %s534 = scalar_lea.vmem %s9, %s533
      %p536 = scmp.eq.s32.totalorder %s31, 0
      // Predicated region
      $region53: #{bibert_embs.1} parent=51 // pred_check
        %p537 = pneg %p536
      $region54: #{bibert_embs.1} parent=51 // pred_check_branch
        %539 = sbr.rel (%p537) target = $region56
      $region55: #{bibert_embs.1} parent=51 // pred_region
        %v540 = vld [vmem:[%s475] sm:$0xff]
        %v541 = vld [vmem:[%s475 + $0x8] sm:$0xff]
        %v542 = vlaneseq
        %v543 = vand.u32 %v542, 127
        %544 = vset.pattern.permute.xlu0 0
        %545 = vperm.xlu0 %544, %v540
        %v546 = vpop.permute.xlu0 %545
        %547 = vset.pattern.permute.xlu0 0
        %548 = vperm.xlu0 %547, %v541
        %v549 = vpop.permute.xlu0 %548
        %vm550 = vcmp.eq.s32.totalorder %v543, %v546
        %vm551 = vcmp.eq.s32.totalorder %v543, %v549
        %v552 = vsel %vm550, 1, 0
        %v553 = vsel %vm551, 1, 0
        %v554 = vcvt.s32.f32 %v552
        %v555 = vcvt.s32.f32 %v553
        %v556 = vld [vmem:[%s485] sm:$0xff]
        %v557 = vld [vmem:[%s485 + $0x8] sm:$0xff]
        %v558 = vld [vmem:[%s485 + $0x10] sm:$0xff]
        %v559 = vld [vmem:[%s485 + $0x18] sm:$0xff]
        %v560 = vld [vmem:[%s485 + $0x20] sm:$0xff]
        %v561 = vld [vmem:[%s485 + $0x28] sm:$0xff]
        %v562 = vld [vmem:[%s485 + $0x30] sm:$0xff]
        %v563 = vld [vmem:[%s485 + $0x38] sm:$0xff]
        %v564 = vld [vmem:[%s485 + $0x40] sm:$0xff]
        %v565 = vld [vmem:[%s485 + $0x48] sm:$0xff]
        %v566 = vld [vmem:[%s485 + $0x50] sm:$0xff]
        %v567 = vld [vmem:[%s485 + $0x58] sm:$0xff]
        %v568 = vld [vmem:[%s485 + $0x60] sm:$0xff]
        %v569 = vld [vmem:[%s485 + $0x68] sm:$0xff]
        %v570 = vld [vmem:[%s485 + $0x70] sm:$0xff]
        %v571 = vld [vmem:[%s485 + $0x78] sm:$0xff]
        %v572 = vld [vmem:[%s491] sm:$0xff]
        %573 = vmatprep.subr.mxu0 0.0
        %574 = vmatpush1.msra.mxu0 %v556
        %575 = vmatprep.subr.mxu0 0.0
        %576 = vmatpush1.msra.mxu0 %v557
        %577 = vmatprep.subr.mxu0 0.0
        %578 = vmatpush1.msra.mxu0 %v558
        %579 = vmatprep.subr.mxu0 0.0
        %580 = vmatpush1.msra.mxu0 %v559
        %581 = vmatprep.subr.mxu0 0.0
        %582 = vmatpush1.msra.mxu0 %v560
        %583 = vmatprep.subr.mxu0 0.0
        %584 = vmatpush1.msra.mxu0 %v561
        %585 = vmatprep.subr.mxu0 0.0
        %586 = vmatpush1.msra.mxu0 %v562
        %587 = vmatprep.subr.mxu0 0.0
        %588 = vmatpush1.msra.mxu0 %v563
        %589 = vmatprep.subr.mxu0 0.0
        %590 = vmatpush1.msra.mxu0 %v564
        %591 = vmatprep.subr.mxu0 0.0
        %592 = vmatpush1.msra.mxu0 %v565
        %593 = vmatprep.subr.mxu0 0.0
        %594 = vmatpush1.msra.mxu0 %v566
        %595 = vmatprep.subr.mxu0 0.0
        %596 = vmatpush1.msra.mxu0 %v567
        %597 = vmatprep.subr.mxu0 0.0
        %598 = vmatpush1.msra.mxu0 %v568
        %599 = vmatprep.subr.mxu0 0.0
        %600 = vmatpush1.msra.mxu0 %v569
        %601 = vmatprep.subr.mxu0 0.0
        %602 = vmatpush1.msra.mxu0 %v570
        %603 = vmatprep.subr.mxu0 0.0
        %604 = vmatpush1.msra.mxu0 %v571
        %605 = vmatprep.subr.mxu0 0.0
        %606 = vmatpush1.msra.mxu0 0.0
        %607 = vmatprep.subr.mxu0 0.0
        %608 = vmatpush1.msra.mxu0 0.0
        %609 = vmatprep.subr.mxu0 0.0
        %610 = vmatpush1.msra.mxu0 0.0
        %611 = vmatprep.subr.mxu0 0.0
        %612 = vmatpush1.msra.mxu0 0.0
        %613 = vmatprep.subr.mxu0 0.0
        %614 = vmatpush1.msra.mxu0 0.0
        %615 = vmatprep.subr.mxu0 0.0
        %616 = vmatpush1.msra.mxu0 0.0
        %617 = vmatprep.subr.mxu0 0.0
        %618 = vmatpush1.msra.mxu0 0.0
        %619 = vmatprep.subr.mxu0 0.0
        %620 = vmatpush1.msra.mxu0 0.0
        %621 = vmatprep.subr.mxu0 0.0
        %622 = vmatpush1.msra.mxu0 0.0
        %623 = vmatprep.subr.mxu0 0.0
        %624 = vmatpush1.msra.mxu0 0.0
        %625 = vmatprep.subr.mxu0 0.0
        %626 = vmatpush1.msra.mxu0 0.0
        %627 = vmatprep.subr.mxu0 0.0
        %628 = vmatpush1.msra.mxu0 0.0
        %629 = vmatprep.subr.mxu0 0.0
        %630 = vmatpush1.msra.mxu0 0.0
        %631 = vmatprep.subr.mxu0 0.0
        %632 = vmatpush1.msra.mxu0 0.0
        %633 = vmatprep.subr.mxu0 0.0
        %634 = vmatpush1.msra.mxu0 0.0
        %635 = vmatprep.subr.mxu0 0.0
        %636 = vmatpush1.msra.mxu0 0.0
        %637 = vmatprep.mubr.f32.mxu0 0.0
        %638 = vmatmul.mubr.f32.gmra.mrb[0].mxu0 %v554
        %v639 = vpop.f32.mrb[0].mxu0
        %v640 = vadd.f32 %v572, %v639
        %v641 = vpop.f32.mrb[0].mxu0
        %642 = vmatprep.mubr.f32.mxu0 0.0
        %643 = vmatmul.mubr.f32.gmra.mrb[0].mxu0 %v555
        %v644 = vpop.f32.mrb[0].mxu0
        %v645 = vadd.f32 %v572, %v644
        %v646 = vpop.f32.mrb[0].mxu0
        %647 = vdwg.mxu0
        %v648 = vld [vmem:[%s497 + $0x2] sm:$0x1]
        %v649 = vlaneseq
        %v650 = vshrl.u32 %v649, 7
        %v651 = vsub.s32 0, %v650
        %v652 = vrot.slane %v648, %v651
        %v653 = vadd.f32 %v640, %v652
        %v654 = vadd.f32 %v645, %v652
        %v655 = vld [vmem:[%s497] sm:$0x1]
        %v656 = vld [vmem:[%s497 + $0x1] sm:$0x1]
        %vm657 = vcmask 261120
        %v658 = vsel %vm657, %v653, 0.0
        %659 = vadd.xlane.f32.xlu0 %v658
        %v660 = vpop.xlane.xlu0 %659
        %v661 = vsel %vm657, %v654, 0.0
        %662 = vadd.xlane.f32.xlu0 %v661
        %v663 = vpop.xlane.xlu0 %662
        %v664 = vrcp.pop 32.0
        %v665 = vmul.f32 %v660, %v664
        %v666 = vmul.f32 %v663, %v664
        %v667 = vsub.f32 %v653, %v665
        %v668 = vsub.f32 %v654, %v666
        %v669 = vmul.f32 %v667, %v667
        %v670 = vmul.f32 %v668, %v668
        %v671 = vsel %vm657, %v669, 0.0
        %672 = vadd.xlane.f32.xlu0 %v671
        %v673 = vpop.xlane.xlu0 %672
        %v674 = vsel %vm657, %v670, 0.0
        %675 = vadd.xlane.f32.xlu0 %v674
        %v676 = vpop.xlane.xlu0 %675
        %v677 = vmul.f32 %v673, %v664
        %v678 = vmul.f32 %v676, %v664
        %v679 = vadd.f32 %v677, 1e-12
        %v680 = vadd.f32 %v678, 1e-12
        %v681 = vrsqrt.pop %v679
        %v682 = vrsqrt.pop %v680
        %v683 = vmul.f32 %v667, %v681
        %v684 = vmul.f32 %v668, %v682
        %v685 = vlaneseq
        %v686 = vshrl.u32 %v685, 7
        %v687 = vsub.s32 0, %v686
        %v688 = vrot.slane %v655, %v687
        %v689 = vmul.f32 %v683, %v688
        %v690 = vmul.f32 %v684, %v688
        %v691 = vlaneseq
        %v692 = vshrl.u32 %v691, 7
        %v693 = vsub.s32 0, %v692
        %v694 = vrot.slane %v656, %v693
        %v695 = vadd.f32 %v689, %v694
        %v696 = vadd.f32 %v690, %v694
        %697 = vst.msk [vmem:[#allocation2] sm:$0xff] %vm657, %v695
        %698 = vst.msk [vmem:[#allocation2 + $0x8] sm:$0xff] %vm657, %v696
      $region56: #{bibert_embs.1} parent=51 // pred_fallthru
        _
      %v699 = vld [vmem:[#allocation2] sm:$0xff]
      %v700 = vld [vmem:[#allocation2 + $0x8] sm:$0xff]
      %v701 = vld [vmem:[%s479] sm:$0x3]
      %v702 = vsub.f32 1.0, %v701
      %v703 = vmul.f32 %v702, -10000.0
      %v704 = vld [vmem:[%s518] sm:$0xff]
      %v705 = vld [vmem:[%s518 + $0x8] sm:$0xff]
      %v706 = vld [vmem:[%s518 + $0x10] sm:$0xff]
      %v707 = vld [vmem:[%s518 + $0x18] sm:$0xff]
      %v708 = vld [vmem:[%s507] sm:$0xff]
      %v709 = vpack.c.bf16 %v700, %v699
      %v710 = vlaneseq
      %v711 = vshrl.u32 %v710, 7
      %v712 = vsub.s32 0, %v711
      %v713 = vrot.slane %v708, %v712
      %v718 = vunpack.c.l.b16 %v704
      %v719 = vunpack.c.l.b16 %v705
      %v720 = vunpack.c.l.b16 %v706
      %v721 = vunpack.c.l.b16 %v707
      %v722 = vpack.c.b16 %v719, %v718
      %v723 = vpack.c.b16 %v721, %v720
      %vm726 = vcmask 261120
      %v728 = vsel %vm726, %v709, 0
      %730 = vmatprep.subr.bf16.mxu0 0
      %731 = vmatpush1.bf16.msra.mxu0 %v722
      %732 = vmatprep.subr.bf16.mxu0 0
      %733 = vmatpush1.bf16.msra.mxu0 %v723
      %734 = vmatprep.subr.bf16.mxu0 0
      %735 = vmatpush1.bf16.msra.mxu0 0
      %736 = vmatprep.subr.bf16.mxu0 0
      %737 = vmatpush1.bf16.msra.mxu0 0
      %738 = vmatprep.subr.bf16.mxu0 0
      %739 = vmatpush1.bf16.msra.mxu0 0
      %740 = vmatprep.subr.bf16.mxu0 0
      %741 = vmatpush1.bf16.msra.mxu0 0
      %742 = vmatprep.subr.bf16.mxu0 0
      %743 = vmatpush1.bf16.msra.mxu0 0
      %744 = vmatprep.subr.bf16.mxu0 0
      %745 = vmatpush1.bf16.msra.mxu0 0
      %746 = vmatprep.subr.bf16.mxu0 0
      %747 = vmatpush1.bf16.msra.mxu0 0
      %748 = vmatprep.subr.bf16.mxu0 0
      %749 = vmatpush1.bf16.msra.mxu0 0
      %750 = vmatprep.subr.bf16.mxu0 0
      %751 = vmatpush1.bf16.msra.mxu0 0
      %752 = vmatprep.subr.bf16.mxu0 0
      %753 = vmatpush1.bf16.msra.mxu0 0
      %754 = vmatprep.subr.bf16.mxu0 0
      %755 = vmatpush1.bf16.msra.mxu0 0
      %756 = vmatprep.subr.bf16.mxu0 0
      %757 = vmatpush1.bf16.msra.mxu0 0
      %758 = vmatprep.subr.bf16.mxu0 0
      %759 = vmatpush1.bf16.msra.mxu0 0
      %760 = vmatprep.subr.bf16.mxu0 0
      %761 = vmatpush1.bf16.msra.mxu0 0
      %762 = vmatprep.mubr.bf16.mxu0 0
      %763 = vmatmul.mubr.bf16.gmra.mrb[0].mxu0 %v728
      %v764 = vpop.f32.mrb[0].mxu0
      %v765 = vadd.f32 %v713, %v764
      %v766 = vpop.f32.mrb[0].mxu0
      %v767 = vpop.f32.mrb[0].mxu0
      %v768 = vadd.f32 %v713, %v767
      %v769 = vpop.f32.mrb[0].mxu0
      %770 = vdwg.mxu0
      %772 = vrot.lane.b32.xlu0 %v765, 96
      %v773 = vpop.permute.xlu0 %772
      %vm774 = vcmask 130048
      %v775 = vsel %vm774, %v765, 0
      %v777 = vsel %vm774, %v773, 0
      %779 = vmatprep.subr.mxu0 0.0
      %780 = vmatpush1.xpose.msra.mxu0 %v777
      %781 = vmatprep.subr.mxu0 0.0
      %782 = vmatpush1.xpose.msra.mxu0 0.0
      %783 = vmatprep.subr.mxu0 0.0
      %784 = vmatpush1.xpose.msra.mxu0 0.0
      %785 = vmatprep.subr.mxu0 0.0
      %786 = vmatpush1.xpose.msra.mxu0 0.0
      %787 = vmatprep.subr.mxu0 0.0
      %788 = vmatpush1.xpose.msra.mxu0 0.0
      %789 = vmatprep.subr.mxu0 0.0
      %790 = vmatpush1.xpose.msra.mxu0 0.0
      %791 = vmatprep.subr.mxu0 0.0
      %792 = vmatpush1.xpose.msra.mxu0 0.0
      %793 = vmatprep.subr.mxu0 0.0
      %794 = vmatpush1.xpose.msra.mxu0 0.0
      %795 = vmatprep.subr.mxu0 0.0
      %796 = vmatpush1.xpose.msra.mxu0 0.0
      %797 = vmatprep.subr.mxu0 0.0
      %798 = vmatpush1.xpose.msra.mxu0 0.0
      %799 = vmatprep.subr.mxu0 0.0
      %800 = vmatpush1.xpose.msra.mxu0 0.0
      %801 = vmatprep.subr.mxu0 0.0
      %802 = vmatpush1.xpose.msra.mxu0 0.0
      %803 = vmatprep.subr.mxu0 0.0
      %804 = vmatpush1.xpose.msra.mxu0 0.0
      %805 = vmatprep.subr.mxu0 0.0
      %806 = vmatpush1.xpose.msra.mxu0 0.0
      %807 = vmatprep.subr.mxu0 0.0
      %808 = vmatpush1.xpose.msra.mxu0 0.0
      %809 = vmatprep.subr.mxu0 0.0
      %810 = vmatpush1.xpose.msra.mxu0 0.0
      %811 = vmatprep.subr.mxu0 0.0
      %812 = vmatpush1.xpose.msra.mxu0 0.0
      %813 = vmatprep.subr.mxu0 0.0
      %814 = vmatpush1.xpose.msra.mxu0 0.0
      %815 = vmatprep.subr.mxu0 0.0
      %816 = vmatpush1.xpose.msra.mxu0 0.0
      %817 = vmatprep.subr.mxu0 0.0
      %818 = vmatpush1.xpose.msra.mxu0 0.0
      %819 = vmatprep.subr.mxu0 0.0
      %820 = vmatpush1.xpose.msra.mxu0 0.0
      %821 = vmatprep.subr.mxu0 0.0
      %822 = vmatpush1.xpose.msra.mxu0 0.0
      %823 = vmatprep.subr.mxu0 0.0
      %824 = vmatpush1.xpose.msra.mxu0 0.0
      %825 = vmatprep.subr.mxu0 0.0
      %826 = vmatpush1.xpose.msra.mxu0 0.0
      %827 = vmatprep.subr.mxu0 0.0
      %828 = vmatpush1.xpose.msra.mxu0 0.0
      %829 = vmatprep.subr.mxu0 0.0
      %830 = vmatpush1.xpose.msra.mxu0 0.0
      %831 = vmatprep.subr.mxu0 0.0
      %832 = vmatpush1.xpose.msra.mxu0 0.0
      %833 = vmatprep.subr.mxu0 0.0
      %834 = vmatpush1.xpose.msra.mxu0 0.0
      %835 = vmatprep.subr.mxu0 0.0
      %836 = vmatpush1.xpose.msra.mxu0 0.0
      %837 = vmatprep.subr.mxu0 0.0
      %838 = vmatpush1.xpose.msra.mxu0 0.0
      %839 = vmatprep.subr.mxu0 0.0
      %840 = vmatpush1.xpose.msra.mxu0 0.0
      %841 = vmatprep.subr.mxu0 0.0
      %842 = vmatpush1.xpose.msra.mxu0 0.0
      %843 = vmatprep.mubr.f32.mxu0 0.0
      %844 = vmatmul.mubr.f32.gmra.mrb[0].mxu0 %v775
      %v845 = vpop.f32.mrb[0].mxu0
      %v846 = vadd.f32 0.0, %v845
      %v847 = vpop.f32.mrb[0].mxu0
      %848 = vdwg.mxu0
      %850 = vrot.lane.b32.xlu0 %v768, 96
      %v851 = vpop.permute.xlu0 %850
      %v852 = vsel %vm774, %v768, 0
      %v854 = vsel %vm774, %v851, 0
      %856 = vmatprep.subr.mxu0 0.0
      %857 = vmatpush1.xpose.msra.mxu0 %v854
      %858 = vmatprep.subr.mxu0 0.0
      %859 = vmatpush1.xpose.msra.mxu0 0.0
      %860 = vmatprep.subr.mxu0 0.0
      %861 = vmatpush1.xpose.msra.mxu0 0.0
      %862 = vmatprep.subr.mxu0 0.0
      %863 = vmatpush1.xpose.msra.mxu0 0.0
      %864 = vmatprep.subr.mxu0 0.0
      %865 = vmatpush1.xpose.msra.mxu0 0.0
      %866 = vmatprep.subr.mxu0 0.0
      %867 = vmatpush1.xpose.msra.mxu0 0.0
      %868 = vmatprep.subr.mxu0 0.0
      %869 = vmatpush1.xpose.msra.mxu0 0.0
      %870 = vmatprep.subr.mxu0 0.0
      %871 = vmatpush1.xpose.msra.mxu0 0.0
      %872 = vmatprep.subr.mxu0 0.0
      %873 = vmatpush1.xpose.msra.mxu0 0.0
      %874 = vmatprep.subr.mxu0 0.0
      %875 = vmatpush1.xpose.msra.mxu0 0.0
      %876 = vmatprep.subr.mxu0 0.0
      %877 = vmatpush1.xpose.msra.mxu0 0.0
      %878 = vmatprep.subr.mxu0 0.0
      %879 = vmatpush1.xpose.msra.mxu0 0.0
      %880 = vmatprep.subr.mxu0 0.0
      %881 = vmatpush1.xpose.msra.mxu0 0.0
      %882 = vmatprep.subr.mxu0 0.0
      %883 = vmatpush1.xpose.msra.mxu0 0.0
      %884 = vmatprep.subr.mxu0 0.0
      %885 = vmatpush1.xpose.msra.mxu0 0.0
      %886 = vmatprep.subr.mxu0 0.0
      %887 = vmatpush1.xpose.msra.mxu0 0.0
      %888 = vmatprep.subr.mxu0 0.0
      %889 = vmatpush1.xpose.msra.mxu0 0.0
      %890 = vmatprep.subr.mxu0 0.0
      %891 = vmatpush1.xpose.msra.mxu0 0.0
      %892 = vmatprep.subr.mxu0 0.0
      %893 = vmatpush1.xpose.msra.mxu0 0.0
      %894 = vmatprep.subr.mxu0 0.0
      %895 = vmatpush1.xpose.msra.mxu0 0.0
      %896 = vmatprep.subr.mxu0 0.0
      %897 = vmatpush1.xpose.msra.mxu0 0.0
      %898 = vmatprep.subr.mxu0 0.0
      %899 = vmatpush1.xpose.msra.mxu0 0.0
      %900 = vmatprep.subr.mxu0 0.0
      %901 = vmatpush1.xpose.msra.mxu0 0.0
      %902 = vmatprep.subr.mxu0 0.0
      %903 = vmatpush1.xpose.msra.mxu0 0.0
      %904 = vmatprep.subr.mxu0 0.0
      %905 = vmatpush1.xpose.msra.mxu0 0.0
      %906 = vmatprep.subr.mxu0 0.0
      %907 = vmatpush1.xpose.msra.mxu0 0.0
      %908 = vmatprep.subr.mxu0 0.0
      %909 = vmatpush1.xpose.msra.mxu0 0.0
      %910 = vmatprep.subr.mxu0 0.0
      %911 = vmatpush1.xpose.msra.mxu0 0.0
      %912 = vmatprep.subr.mxu0 0.0
      %913 = vmatpush1.xpose.msra.mxu0 0.0
      %914 = vmatprep.subr.mxu0 0.0
      %915 = vmatpush1.xpose.msra.mxu0 0.0
      %916 = vmatprep.subr.mxu0 0.0
      %917 = vmatpush1.xpose.msra.mxu0 0.0
      %918 = vmatprep.subr.mxu0 0.0
      %919 = vmatpush1.xpose.msra.mxu0 0.0
      %920 = vmatprep.mubr.f32.mxu0 0.0
      %921 = vmatmul.mubr.f32.gmra.mrb[0].mxu0 %v852
      %v922 = vpop.f32.mrb[0].mxu0
      %v923 = vadd.f32 0.0, %v922
      %v924 = vpop.f32.mrb[0].mxu0
      %925 = vdwg.mxu0
      %v926 = vmul.f32 %v846, 0.25
      %v927 = vmul.f32 %v923, 0.25
      %v930 = vunpack.c.l.s4 1966171168
      %v931 = vunpack.c.0.s8 %v930
      %v932 = vlaneseq
      %v933 = vshrl.u32 %v932, 7
      %v934 = vsub.s32 %v931, %v933
      %v935 = vrot.slane %v703, %v934
      %v936 = vcombine.high %v935, %v935
      %v938 = vunpack.c.l.s4 1966171168
      %v939 = vunpack.c.0.s8 %v938
      %v940 = vlaneseq
      %v941 = vshrl.u32 %v940, 7
      %v942 = vsub.s32 %v939, %v941
      %v943 = vrot.slane %v935, %v942
      %v945 = vunpack.c.l.s4 1966171168
      %v946 = vunpack.c.0.s8 %v945
      %v947 = vlaneseq
      %v948 = vshrl.u32 %v947, 7
      %v949 = vsub.s32 %v946, %v948
      %v950 = vrot.slane %v936, %v949
      %v951 = vlaneseq
      %v952 = vshrl.u32 %v951, 7
      %v953 = vsub.s32 0, %v952
      %v954 = vrot.slane %v943, %v953
      %v955 = vlaneseq
      %v956 = vshrl.u32 %v955, 7
      %v957 = vsub.s32 0, %v956
      %v958 = vrot.slane %v950, %v957
      %v961 = vadd.f32 %v926, %v954
      %v962 = vadd.f32 %v927, %v958
      %vm963 = vcmask 64512
      %v964 = vsel %vm963, %v961, -inf
      %965 = vmax.xlane.f32.xlu0 %v964
      %v966 = vpop.xlane.xlu0 %965
      %v967 = vsel %vm963, %v962, -inf
      %968 = vmax.xlane.f32.xlu0 %v967
      %v969 = vpop.xlane.xlu0 %968
      %v970 = vsub.f32 %v961, %v966
      %v971 = vsub.f32 %v962, %v969
      %v972 = vmul.f32 %v970, 1.442695
      %v973 = vpow.pop %v972
      %v974 = vmul.f32 %v971, 1.442695
      %v975 = vpow.pop %v974
      %v976 = vsel %vm963, %v973, 0.0
      %977 = vadd.xlane.f32.xlu0 %v976
      %v978 = vpop.xlane.xlu0 %977
      %v979 = vsel %vm963, %v975, 0.0
      %980 = vadd.xlane.f32.xlu0 %v979
      %v981 = vpop.xlane.xlu0 %980
      %v982 = vrcp.pop %v978
      %v983 = vmul.f32 %v973, %v982
      %v984 = vrcp.pop %v981
      %v985 = vmul.f32 %v975, %v984
      %986 = vrot.lane.b32.xlu0 %v765, 64
      %v987 = vpop.permute.xlu0 %986
      %v990 = vsel %vm963, %v983, 0
      %992 = vmatprep.subr.mxu0 0.0
      %993 = vmatpush1.msra.mxu0 %v987
      %994 = vmatprep.subr.mxu0 0.0
      %995 = vmatpush1.msra.mxu0 0.0
      %996 = vmatprep.subr.mxu0 0.0
      %997 = vmatpush1.msra.mxu0 0.0
      %998 = vmatprep.subr.mxu0 0.0
      %999 = vmatpush1.msra.mxu0 0.0
      %1000 = vmatprep.subr.mxu0 0.0
      %1001 = vmatpush1.msra.mxu0 0.0
      %1002 = vmatprep.subr.mxu0 0.0
      %1003 = vmatpush1.msra.mxu0 0.0
      %1004 = vmatprep.subr.mxu0 0.0
      %1005 = vmatpush1.msra.mxu0 0.0
      %1006 = vmatprep.subr.mxu0 0.0
      %1007 = vmatpush1.msra.mxu0 0.0
      %1008 = vmatprep.subr.mxu0 0.0
      %1009 = vmatpush1.msra.mxu0 0.0
      %1010 = vmatprep.subr.mxu0 0.0
      %1011 = vmatpush1.msra.mxu0 0.0
      %1012 = vmatprep.subr.mxu0 0.0
      %1013 = vmatpush1.msra.mxu0 0.0
      %1014 = vmatprep.subr.mxu0 0.0
      %1015 = vmatpush1.msra.mxu0 0.0
      %1016 = vmatprep.subr.mxu0 0.0
      %1017 = vmatpush1.msra.mxu0 0.0
      %1018 = vmatprep.subr.mxu0 0.0
      %1019 = vmatpush1.msra.mxu0 0.0
      %1020 = vmatprep.subr.mxu0 0.0
      %1021 = vmatpush1.msra.mxu0 0.0
      %1022 = vmatprep.subr.mxu0 0.0
      %1023 = vmatpush1.msra.mxu0 0.0
      %1024 = vmatprep.subr.mxu0 0.0
      %1025 = vmatpush1.msra.mxu0 0.0
      %1026 = vmatprep.subr.mxu0 0.0
      %1027 = vmatpush1.msra.mxu0 0.0
      %1028 = vmatprep.subr.mxu0 0.0
      %1029 = vmatpush1.msra.mxu0 0.0
      %1030 = vmatprep.subr.mxu0 0.0
      %1031 = vmatpush1.msra.mxu0 0.0
      %1032 = vmatprep.subr.mxu0 0.0
      %1033 = vmatpush1.msra.mxu0 0.0
      %1034 = vmatprep.subr.mxu0 0.0
      %1035 = vmatpush1.msra.mxu0 0.0
      %1036 = vmatprep.subr.mxu0 0.0
      %1037 = vmatpush1.msra.mxu0 0.0
      %1038 = vmatprep.subr.mxu0 0.0
      %1039 = vmatpush1.msra.mxu0 0.0
      %1040 = vmatprep.subr.mxu0 0.0
      %1041 = vmatpush1.msra.mxu0 0.0
      %1042 = vmatprep.subr.mxu0 0.0
      %1043 = vmatpush1.msra.mxu0 0.0
      %1044 = vmatprep.subr.mxu0 0.0
      %1045 = vmatpush1.msra.mxu0 0.0
      %1046 = vmatprep.subr.mxu0 0.0
      %1047 = vmatpush1.msra.mxu0 0.0
      %1048 = vmatprep.subr.mxu0 0.0
      %1049 = vmatpush1.msra.mxu0 0.0
      %1050 = vmatprep.subr.mxu0 0.0
      %1051 = vmatpush1.msra.mxu0 0.0
      %1052 = vmatprep.subr.mxu0 0.0
      %1053 = vmatpush1.msra.mxu0 0.0
      %1054 = vmatprep.subr.mxu0 0.0
      %1055 = vmatpush1.msra.mxu0 0.0
      %1056 = vmatprep.mubr.f32.mxu0 0.0
      %1057 = vmatmul.mubr.f32.gmra.mrb[0].mxu0 %v990
      %v1058 = vpop.f32.mrb[0].mxu0
      %v1059 = vadd.f32 0.0, %v1058
      %v1060 = vpop.f32.mrb[0].mxu0
      %1061 = vdwg.mxu0
      %1062 = vrot.lane.b32.xlu0 %v768, 64
      %v1063 = vpop.permute.xlu0 %1062
      %v1066 = vsel %vm963, %v985, 0
      %1068 = vmatprep.subr.mxu0 0.0
      %1069 = vmatpush1.msra.mxu0 %v1063
      %1070 = vmatprep.subr.mxu0 0.0
      %1071 = vmatpush1.msra.mxu0 0.0
      %1072 = vmatprep.subr.mxu0 0.0
      %1073 = vmatpush1.msra.mxu0 0.0
      %1074 = vmatprep.subr.mxu0 0.0
      %1075 = vmatpush1.msra.mxu0 0.0
      %1076 = vmatprep.subr.mxu0 0.0
      %1077 = vmatpush1.msra.mxu0 0.0
      %1078 = vmatprep.subr.mxu0 0.0
      %1079 = vmatpush1.msra.mxu0 0.0
      %1080 = vmatprep.subr.mxu0 0.0
      %1081 = vmatpush1.msra.mxu0 0.0
      %1082 = vmatprep.subr.mxu0 0.0
      %1083 = vmatpush1.msra.mxu0 0.0
      %1084 = vmatprep.subr.mxu0 0.0
      %1085 = vmatpush1.msra.mxu0 0.0
      %1086 = vmatprep.subr.mxu0 0.0
      %1087 = vmatpush1.msra.mxu0 0.0
      %1088 = vmatprep.subr.mxu0 0.0
      %1089 = vmatpush1.msra.mxu0 0.0
      %1090 = vmatprep.subr.mxu0 0.0
      %1091 = vmatpush1.msra.mxu0 0.0
      %1092 = vmatprep.subr.mxu0 0.0
      %1093 = vmatpush1.msra.mxu0 0.0
      %1094 = vmatprep.subr.mxu0 0.0
      %1095 = vmatpush1.msra.mxu0 0.0
      %1096 = vmatprep.subr.mxu0 0.0
      %1097 = vmatpush1.msra.mxu0 0.0
      %1098 = vmatprep.subr.mxu0 0.0
      %1099 = vmatpush1.msra.mxu0 0.0
      %1100 = vmatprep.subr.mxu0 0.0
      %1101 = vmatpush1.msra.mxu0 0.0
      %1102 = vmatprep.subr.mxu0 0.0
      %1103 = vmatpush1.msra.mxu0 0.0
      %1104 = vmatprep.subr.mxu0 0.0
      %1105 = vmatpush1.msra.mxu0 0.0
      %1106 = vmatprep.subr.mxu0 0.0
      %1107 = vmatpush1.msra.mxu0 0.0
      %1108 = vmatprep.subr.mxu0 0.0
      %1109 = vmatpush1.msra.mxu0 0.0
      %1110 = vmatprep.subr.mxu0 0.0
      %1111 = vmatpush1.msra.mxu0 0.0
      %1112 = vmatprep.subr.mxu0 0.0
      %1113 = vmatpush1.msra.mxu0 0.0
      %1114 = vmatprep.subr.mxu0 0.0
      %1115 = vmatpush1.msra.mxu0 0.0
      %1116 = vmatprep.subr.mxu0 0.0
      %1117 = vmatpush1.msra.mxu0 0.0
      %1118 = vmatprep.subr.mxu0 0.0
      %1119 = vmatpush1.msra.mxu0 0.0
      %1120 = vmatprep.subr.mxu0 0.0
      %1121 = vmatpush1.msra.mxu0 0.0
      %1122 = vmatprep.subr.mxu0 0.0
      %1123 = vmatpush1.msra.mxu0 0.0
      %1124 = vmatprep.subr.mxu0 0.0
      %1125 = vmatpush1.msra.mxu0 0.0
      %1126 = vmatprep.subr.mxu0 0.0
      %1127 = vmatpush1.msra.mxu0 0.0
      %1128 = vmatprep.subr.mxu0 0.0
      %1129 = vmatpush1.msra.mxu0 0.0
      %1130 = vmatprep.subr.mxu0 0.0
      %1131 = vmatpush1.msra.mxu0 0.0
      %1132 = vmatprep.mubr.f32.mxu0 0.0
      %1133 = vmatmul.mubr.f32.gmra.mrb[0].mxu0 %v1066
      %v1134 = vpop.f32.mrb[0].mxu0
      %v1135 = vadd.f32 0.0, %v1134
      %v1136 = vpop.f32.mrb[0].mxu0
      %1137 = vdwg.mxu0
      %1138 = vrot.lane.b32.xlu0 %v765, 112
      %v1139 = vpop.permute.xlu0 %1138
      %1140 = vrot.lane.b32.xlu0 %v765, 80
      %v1141 = vpop.permute.xlu0 %1140
      %v1142 = vsel %vm774, %v1139, 0
      %v1144 = vsel %vm774, %v1141, 0
      %1146 = vmatprep.subr.mxu0 0.0
      %1147 = vmatpush1.xpose.msra.mxu0 %v1144
      %1148 = vmatprep.subr.mxu0 0.0
      %1149 = vmatpush1.xpose.msra.mxu0 0.0
      %1150 = vmatprep.subr.mxu0 0.0
      %1151 = vmatpush1.xpose.msra.mxu0 0.0
      %1152 = vmatprep.subr.mxu0 0.0
      %1153 = vmatpush1.xpose.msra.mxu0 0.0
      %1154 = vmatprep.subr.mxu0 0.0
      %1155 = vmatpush1.xpose.msra.mxu0 0.0
      %1156 = vmatprep.subr.mxu0 0.0
      %1157 = vmatpush1.xpose.msra.mxu0 0.0
      %1158 = vmatprep.subr.mxu0 0.0
      %1159 = vmatpush1.xpose.msra.mxu0 0.0
      %1160 = vmatprep.subr.mxu0 0.0
      %1161 = vmatpush1.xpose.msra.mxu0 0.0
      %1162 = vmatprep.subr.mxu0 0.0
      %1163 = vmatpush1.xpose.msra.mxu0 0.0
      %1164 = vmatprep.subr.mxu0 0.0
      %1165 = vmatpush1.xpose.msra.mxu0 0.0
      %1166 = vmatprep.subr.mxu0 0.0
      %1167 = vmatpush1.xpose.msra.mxu0 0.0
      %1168 = vmatprep.subr.mxu0 0.0
      %1169 = vmatpush1.xpose.msra.mxu0 0.0
      %1170 = vmatprep.subr.mxu0 0.0
      %1171 = vmatpush1.xpose.msra.mxu0 0.0
      %1172 = vmatprep.subr.mxu0 0.0
      %1173 = vmatpush1.xpose.msra.mxu0 0.0
      %1174 = vmatprep.subr.mxu0 0.0
      %1175 = vmatpush1.xpose.msra.mxu0 0.0
      %1176 = vmatprep.subr.mxu0 0.0
      %1177 = vmatpush1.xpose.msra.mxu0 0.0
      %1178 = vmatprep.subr.mxu0 0.0
      %1179 = vmatpush1.xpose.msra.mxu0 0.0
      %1180 = vmatprep.subr.mxu0 0.0
      %1181 = vmatpush1.xpose.msra.mxu0 0.0
      %1182 = vmatprep.subr.mxu0 0.0
      %1183 = vmatpush1.xpose.msra.mxu0 0.0
      %1184 = vmatprep.subr.mxu0 0.0
      %1185 = vmatpush1.xpose.msra.mxu0 0.0
      %1186 = vmatprep.subr.mxu0 0.0
      %1187 = vmatpush1.xpose.msra.mxu0 0.0
      %1188 = vmatprep.subr.mxu0 0.0
      %1189 = vmatpush1.xpose.msra.mxu0 0.0
      %1190 = vmatprep.subr.mxu0 0.0
      %1191 = vmatpush1.xpose.msra.mxu0 0.0
      %1192 = vmatprep.subr.mxu0 0.0
      %1193 = vmatpush1.xpose.msra.mxu0 0.0
      %1194 = vmatprep.subr.mxu0 0.0
      %1195 = vmatpush1.xpose.msra.mxu0 0.0
      %1196 = vmatprep.subr.mxu0 0.0
      %1197 = vmatpush1.xpose.msra.mxu0 0.0
      %1198 = vmatprep.subr.mxu0 0.0
      %1199 = vmatpush1.xpose.msra.mxu0 0.0
      %1200 = vmatprep.subr.mxu0 0.0
      %1201 = vmatpush1.xpose.msra.mxu0 0.0
      %1202 = vmatprep.subr.mxu0 0.0
      %1203 = vmatpush1.xpose.msra.mxu0 0.0
      %1204 = vmatprep.subr.mxu0 0.0
      %1205 = vmatpush1.xpose.msra.mxu0 0.0
      %1206 = vmatprep.subr.mxu0 0.0
      %1207 = vmatpush1.xpose.msra.mxu0 0.0
      %1208 = vmatprep.subr.mxu0 0.0
      %1209 = vmatpush1.xpose.msra.mxu0 0.0
      %1210 = vmatprep.mubr.f32.mxu0 0.0
      %1211 = vmatmul.mubr.f32.gmra.mrb[0].mxu0 %v1142
      %v1212 = vpop.f32.mrb[0].mxu0
      %v1213 = vadd.f32 0.0, %v1212
      %v1214 = vpop.f32.mrb[0].mxu0
      %1215 = vdwg.mxu0
      %1216 = vrot.lane.b32.xlu0 %v768, 112
      %v1217 = vpop.permute.xlu0 %1216
      %1218 = vrot.lane.b32.xlu0 %v768, 80
      %v1219 = vpop.permute.xlu0 %1218
      %v1220 = vsel %vm774, %v1217, 0
      %v1222 = vsel %vm774, %v1219, 0
      %1224 = vmatprep.subr.mxu0 0.0
      %1225 = vmatpush1.xpose.msra.mxu0 %v1222
      %1226 = vmatprep.subr.mxu0 0.0
      %1227 = vmatpush1.xpose.msra.mxu0 0.0
      %1228 = vmatprep.subr.mxu0 0.0
      %1229 = vmatpush1.xpose.msra.mxu0 0.0
      %1230 = vmatprep.subr.mxu0 0.0
      %1231 = vmatpush1.xpose.msra.mxu0 0.0
      %1232 = vmatprep.subr.mxu0 0.0
      %1233 = vmatpush1.xpose.msra.mxu0 0.0
      %1234 = vmatprep.subr.mxu0 0.0
      %1235 = vmatpush1.xpose.msra.mxu0 0.0
      %1236 = vmatprep.subr.mxu0 0.0
      %1237 = vmatpush1.xpose.msra.mxu0 0.0
      %1238 = vmatprep.subr.mxu0 0.0
      %1239 = vmatpush1.xpose.msra.mxu0 0.0
      %1240 = vmatprep.subr.mxu0 0.0
      %1241 = vmatpush1.xpose.msra.mxu0 0.0
      %1242 = vmatprep.subr.mxu0 0.0
      %1243 = vmatpush1.xpose.msra.mxu0 0.0
      %1244 = vmatprep.subr.mxu0 0.0
      %1245 = vmatpush1.xpose.msra.mxu0 0.0
      %1246 = vmatprep.subr.mxu0 0.0
      %1247 = vmatpush1.xpose.msra.mxu0 0.0
      %1248 = vmatprep.subr.mxu0 0.0
      %1249 = vmatpush1.xpose.msra.mxu0 0.0
      %1250 = vmatprep.subr.mxu0 0.0
      %1251 = vmatpush1.xpose.msra.mxu0 0.0
      %1252 = vmatprep.subr.mxu0 0.0
      %1253 = vmatpush1.xpose.msra.mxu0 0.0
      %1254 = vmatprep.subr.mxu0 0.0
      %1255 = vmatpush1.xpose.msra.mxu0 0.0
      %1256 = vmatprep.subr.mxu0 0.0
      %1257 = vmatpush1.xpose.msra.mxu0 0.0
      %1258 = vmatprep.subr.mxu0 0.0
      %1259 = vmatpush1.xpose.msra.mxu0 0.0
      %1260 = vmatprep.subr.mxu0 0.0
      %1261 = vmatpush1.xpose.msra.mxu0 0.0
      %1262 = vmatprep.subr.mxu0 0.0
      %1263 = vmatpush1.xpose.msra.mxu0 0.0
      %1264 = vmatprep.subr.mxu0 0.0
      %1265 = vmatpush1.xpose.msra.mxu0 0.0
      %1266 = vmatprep.subr.mxu0 0.0
      %1267 = vmatpush1.xpose.msra.mxu0 0.0
      %1268 = vmatprep.subr.mxu0 0.0
      %1269 = vmatpush1.xpose.msra.mxu0 0.0
      %1270 = vmatprep.subr.mxu0 0.0
      %1271 = vmatpush1.xpose.msra.mxu0 0.0
      %1272 = vmatprep.subr.mxu0 0.0
      %1273 = vmatpush1.xpose.msra.mxu0 0.0
      %1274 = vmatprep.subr.mxu0 0.0
      %1275 = vmatpush1.xpose.msra.mxu0 0.0
      %1276 = vmatprep.subr.mxu0 0.0
      %1277 = vmatpush1.xpose.msra.mxu0 0.0
      %1278 = vmatprep.subr.mxu0 0.0
      %1279 = vmatpush1.xpose.msra.mxu0 0.0
      %1280 = vmatprep.subr.mxu0 0.0
      %1281 = vmatpush1.xpose.msra.mxu0 0.0
      %1282 = vmatprep.subr.mxu0 0.0
      %1283 = vmatpush1.xpose.msra.mxu0 0.0
      %1284 = vmatprep.subr.mxu0 0.0
      %1285 = vmatpush1.xpose.msra.mxu0 0.0
      %1286 = vmatprep.subr.mxu0 0.0
      %1287 = vmatpush1.xpose.msra.mxu0 0.0
      %1288 = vmatprep.mubr.f32.mxu0 0.0
      %1289 = vmatmul.mubr.f32.gmra.mrb[0].mxu0 %v1220
      %v1290 = vpop.f32.mrb[0].mxu0
      %v1291 = vadd.f32 0.0, %v1290
      %v1292 = vpop.f32.mrb[0].mxu0
      %1293 = vdwg.mxu0
      %v1294 = vmul.f32 %v1213, 0.25
      %v1295 = vmul.f32 %v1291, 0.25
      %v1296 = vadd.f32 %v1294, %v954
      %v1297 = vadd.f32 %v1295, %v958
      %v1298 = vsel %vm963, %v1296, -inf
      %1299 = vmax.xlane.f32.xlu0 %v1298
      %v1300 = vpop.xlane.xlu0 %1299
      %v1301 = vsel %vm963, %v1297, -inf
      %1302 = vmax.xlane.f32.xlu0 %v1301
      %v1303 = vpop.xlane.xlu0 %1302
      %v1304 = vsub.f32 %v1296, %v1300
      %v1305 = vsub.f32 %v1297, %v1303
      %v1306 = vmul.f32 %v1304, 1.442695
      %v1307 = vpow.pop %v1306
      %v1308 = vmul.f32 %v1305, 1.442695
      %v1309 = vpow.pop %v1308
      %v1310 = vsel %vm963, %v1307, 0.0
      %1311 = vadd.xlane.f32.xlu0 %v1310
      %v1312 = vpop.xlane.xlu0 %1311
      %v1313 = vsel %vm963, %v1309, 0.0
      %1314 = vadd.xlane.f32.xlu0 %v1313
      %v1315 = vpop.xlane.xlu0 %1314
      %v1316 = vrcp.pop %v1312
      %v1317 = vmul.f32 %v1307, %v1316
      %v1318 = vrcp.pop %v1315
      %v1319 = vmul.f32 %v1309, %v1318
      %1320 = vrot.lane.b32.xlu0 %v765, 48
      %v1321 = vpop.permute.xlu0 %1320
      %v1324 = vsel %vm963, %v1317, 0
      %1326 = vmatprep.subr.mxu0 0.0
      %1327 = vmatpush1.msra.mxu0 %v1321
      %1328 = vmatprep.subr.mxu0 0.0
      %1329 = vmatpush1.msra.mxu0 0.0
      %1330 = vmatprep.subr.mxu0 0.0
      %1331 = vmatpush1.msra.mxu0 0.0
      %1332 = vmatprep.subr.mxu0 0.0
      %1333 = vmatpush1.msra.mxu0 0.0
      %1334 = vmatprep.subr.mxu0 0.0
      %1335 = vmatpush1.msra.mxu0 0.0
      %1336 = vmatprep.subr.mxu0 0.0
      %1337 = vmatpush1.msra.mxu0 0.0
      %1338 = vmatprep.subr.mxu0 0.0
      %1339 = vmatpush1.msra.mxu0 0.0
      %1340 = vmatprep.subr.mxu0 0.0
      %1341 = vmatpush1.msra.mxu0 0.0
      %1342 = vmatprep.subr.mxu0 0.0
      %1343 = vmatpush1.msra.mxu0 0.0
      %1344 = vmatprep.subr.mxu0 0.0
      %1345 = vmatpush1.msra.mxu0 0.0
      %1346 = vmatprep.subr.mxu0 0.0
      %1347 = vmatpush1.msra.mxu0 0.0
      %1348 = vmatprep.subr.mxu0 0.0
      %1349 = vmatpush1.msra.mxu0 0.0
      %1350 = vmatprep.subr.mxu0 0.0
      %1351 = vmatpush1.msra.mxu0 0.0
      %1352 = vmatprep.subr.mxu0 0.0
      %1353 = vmatpush1.msra.mxu0 0.0
      %1354 = vmatprep.subr.mxu0 0.0
      %1355 = vmatpush1.msra.mxu0 0.0
      %1356 = vmatprep.subr.mxu0 0.0
      %1357 = vmatpush1.msra.mxu0 0.0
      %1358 = vmatprep.subr.mxu0 0.0
      %1359 = vmatpush1.msra.mxu0 0.0
      %1360 = vmatprep.subr.mxu0 0.0
      %1361 = vmatpush1.msra.mxu0 0.0
      %1362 = vmatprep.subr.mxu0 0.0
      %1363 = vmatpush1.msra.mxu0 0.0
      %1364 = vmatprep.subr.mxu0 0.0
      %1365 = vmatpush1.msra.mxu0 0.0
      %1366 = vmatprep.subr.mxu0 0.0
      %1367 = vmatpush1.msra.mxu0 0.0
      %1368 = vmatprep.subr.mxu0 0.0
      %1369 = vmatpush1.msra.mxu0 0.0
      %1370 = vmatprep.subr.mxu0 0.0
      %1371 = vmatpush1.msra.mxu0 0.0
      %1372 = vmatprep.subr.mxu0 0.0
      %1373 = vmatpush1.msra.mxu0 0.0
      %1374 = vmatprep.subr.mxu0 0.0
      %1375 = vmatpush1.msra.mxu0 0.0
      %1376 = vmatprep.subr.mxu0 0.0
      %1377 = vmatpush1.msra.mxu0 0.0
      %1378 = vmatprep.subr.mxu0 0.0
      %1379 = vmatpush1.msra.mxu0 0.0
      %1380 = vmatprep.subr.mxu0 0.0
      %1381 = vmatpush1.msra.mxu0 0.0
      %1382 = vmatprep.subr.mxu0 0.0
      %1383 = vmatpush1.msra.mxu0 0.0
      %1384 = vmatprep.subr.mxu0 0.0
      %1385 = vmatpush1.msra.mxu0 0.0
      %1386 = vmatprep.subr.mxu0 0.0
      %1387 = vmatpush1.msra.mxu0 0.0
      %1388 = vmatprep.subr.mxu0 0.0
      %1389 = vmatpush1.msra.mxu0 0.0
      %1390 = vmatprep.mubr.f32.mxu0 0.0
      %1391 = vmatmul.mubr.f32.gmra.mrb[0].mxu0 %v1324
      %v1392 = vpop.f32.mrb[0].mxu0
      %v1393 = vadd.f32 0.0, %v1392
      %v1394 = vpop.f32.mrb[0].mxu0
      %1395 = vdwg.mxu0
      %1396 = vrot.lane.b32.xlu0 %v768, 48
      %v1397 = vpop.permute.xlu0 %1396
      %v1400 = vsel %vm963, %v1319, 0
      %1402 = vmatprep.subr.mxu0 0.0
      %1403 = vmatpush1.msra.mxu0 %v1397
      %1404 = vmatprep.subr.mxu0 0.0
      %1405 = vmatpush1.msra.mxu0 0.0
      %1406 = vmatprep.subr.mxu0 0.0
      %1407 = vmatpush1.msra.mxu0 0.0
      %1408 = vmatprep.subr.mxu0 0.0
      %1409 = vmatpush1.msra.mxu0 0.0
      %1410 = vmatprep.subr.mxu0 0.0
      %1411 = vmatpush1.msra.mxu0 0.0
      %1412 = vmatprep.subr.mxu0 0.0
      %1413 = vmatpush1.msra.mxu0 0.0
      %1414 = vmatprep.subr.mxu0 0.0
      %1415 = vmatpush1.msra.mxu0 0.0
      %1416 = vmatprep.subr.mxu0 0.0
      %1417 = vmatpush1.msra.mxu0 0.0
      %1418 = vmatprep.subr.mxu0 0.0
      %1419 = vmatpush1.msra.mxu0 0.0
      %1420 = vmatprep.subr.mxu0 0.0
      %1421 = vmatpush1.msra.mxu0 0.0
      %1422 = vmatprep.subr.mxu0 0.0
      %1423 = vmatpush1.msra.mxu0 0.0
      %1424 = vmatprep.subr.mxu0 0.0
      %1425 = vmatpush1.msra.mxu0 0.0
      %1426 = vmatprep.subr.mxu0 0.0
      %1427 = vmatpush1.msra.mxu0 0.0
      %1428 = vmatprep.subr.mxu0 0.0
      %1429 = vmatpush1.msra.mxu0 0.0
      %1430 = vmatprep.subr.mxu0 0.0
      %1431 = vmatpush1.msra.mxu0 0.0
      %1432 = vmatprep.subr.mxu0 0.0
      %1433 = vmatpush1.msra.mxu0 0.0
      %1434 = vmatprep.subr.mxu0 0.0
      %1435 = vmatpush1.msra.mxu0 0.0
      %1436 = vmatprep.subr.mxu0 0.0
      %1437 = vmatpush1.msra.mxu0 0.0
      %1438 = vmatprep.subr.mxu0 0.0
      %1439 = vmatpush1.msra.mxu0 0.0
      %1440 = vmatprep.subr.mxu0 0.0
      %1441 = vmatpush1.msra.mxu0 0.0
      %1442 = vmatprep.subr.mxu0 0.0
      %1443 = vmatpush1.msra.mxu0 0.0
      %1444 = vmatprep.subr.mxu0 0.0
      %1445 = vmatpush1.msra.mxu0 0.0
      %1446 = vmatprep.subr.mxu0 0.0
      %1447 = vmatpush1.msra.mxu0 0.0
      %1448 = vmatprep.subr.mxu0 0.0
      %1449 = vmatpush1.msra.mxu0 0.0
      %1450 = vmatprep.subr.mxu0 0.0
      %1451 = vmatpush1.msra.mxu0 0.0
      %1452 = vmatprep.subr.mxu0 0.0
      %1453 = vmatpush1.msra.mxu0 0.0
      %1454 = vmatprep.subr.mxu0 0.0
      %1455 = vmatpush1.msra.mxu0 0.0
      %1456 = vmatprep.subr.mxu0 0.0
      %1457 = vmatpush1.msra.mxu0 0.0
      %1458 = vmatprep.subr.mxu0 0.0
      %1459 = vmatpush1.msra.mxu0 0.0
      %1460 = vmatprep.subr.mxu0 0.0
      %1461 = vmatpush1.msra.mxu0 0.0
      %1462 = vmatprep.subr.mxu0 0.0
      %1463 = vmatpush1.msra.mxu0 0.0
      %1464 = vmatprep.subr.mxu0 0.0
      %1465 = vmatpush1.msra.mxu0 0.0
      %1466 = vmatprep.mubr.f32.mxu0 0.0
      %1467 = vmatmul.mubr.f32.gmra.mrb[0].mxu0 %v1400
      %v1468 = vpop.f32.mrb[0].mxu0
      %v1469 = vadd.f32 0.0, %v1468
      %v1470 = vpop.f32.mrb[0].mxu0
      %1471 = vdwg.mxu0
      %1474 = vrot.lane.b32.xlu0 %v1393, 16
      %v1475 = vpop.permute.xlu0 %1474
      %1476 = vrot.lane.b32.xlu0 %v1469, 16
      %v1477 = vpop.permute.xlu0 %1476
      %v1480 = vsel %vm774, %v1059, %v1475
      %v1481 = vsel %vm774, %v1135, %v1477
      %v1482 = vpack.c.bf16 %v1481, %v1480
      %v1483 = vlaneseq
      %v1484 = vshrl.u32 %v1483, 7
      %v1485 = vsub.s32 1, %v1484
      %v1486 = vrot.slane %v708, %v1485
      %1487 = vrot.lane.b32.xlu0 %v722, 32
      %v1488 = vpop.permute.xlu0 %1487
      %1489 = vrot.lane.b32.xlu0 %v723, 32
      %v1490 = vpop.permute.xlu0 %1489
      %v1494 = vsel %vm726, %v1482, 0
      %1496 = vmatprep.subr.bf16.mxu0 0
      %1497 = vmatpush1.bf16.msra.mxu0 %v1488
      %1498 = vmatprep.subr.bf16.mxu0 0
      %1499 = vmatpush1.bf16.msra.mxu0 %v1490
      %1500 = vmatprep.subr.bf16.mxu0 0
      %1501 = vmatpush1.bf16.msra.mxu0 0
      %1502 = vmatprep.subr.bf16.mxu0 0
      %1503 = vmatpush1.bf16.msra.mxu0 0
      %1504 = vmatprep.subr.bf16.mxu0 0
      %1505 = vmatpush1.bf16.msra.mxu0 0
      %1506 = vmatprep.subr.bf16.mxu0 0
      %1507 = vmatpush1.bf16.msra.mxu0 0
      %1508 = vmatprep.subr.bf16.mxu0 0
      %1509 = vmatpush1.bf16.msra.mxu0 0
      %1510 = vmatprep.subr.bf16.mxu0 0
      %1511 = vmatpush1.bf16.msra.mxu0 0
      %1512 = vmatprep.subr.bf16.mxu0 0
      %1513 = vmatpush1.bf16.msra.mxu0 0
      %1514 = vmatprep.subr.bf16.mxu0 0
      %1515 = vmatpush1.bf16.msra.mxu0 0
      %1516 = vmatprep.subr.bf16.mxu0 0
      %1517 = vmatpush1.bf16.msra.mxu0 0
      %1518 = vmatprep.subr.bf16.mxu0 0
      %1519 = vmatpush1.bf16.msra.mxu0 0
      %1520 = vmatprep.subr.bf16.mxu0 0
      %1521 = vmatpush1.bf16.msra.mxu0 0
      %1522 = vmatprep.subr.bf16.mxu0 0
      %1523 = vmatpush1.bf16.msra.mxu0 0
      %1524 = vmatprep.subr.bf16.mxu0 0
      %1525 = vmatpush1.bf16.msra.mxu0 0
      %1526 = vmatprep.subr.bf16.mxu0 0
      %1527 = vmatpush1.bf16.msra.mxu0 0
      %1528 = vmatprep.mubr.bf16.mxu0 0
      %1529 = vmatmul.mubr.bf16.gmra.mrb[0].mxu0 %v1494
      %v1530 = vpop.f32.mrb[0].mxu0
      %v1531 = vadd.f32 %v1486, %v1530
      %v1532 = vpop.f32.mrb[0].mxu0
      %v1533 = vpop.f32.mrb[0].mxu0
      %v1534 = vadd.f32 %v1486, %v1533
      %v1535 = vpop.f32.mrb[0].mxu0
      %1536 = vdwg.mxu0
      %v1537 = vadd.f32 %v1531, %v699
      %v1538 = vadd.f32 %v1534, %v700
      %v1539 = vsel %vm726, %v1537, 0.0
      %1540 = vadd.xlane.f32.xlu0 %v1539
      %v1541 = vpop.xlane.xlu0 %1540
      %v1542 = vsel %vm726, %v1538, 0.0
      %1543 = vadd.xlane.f32.xlu0 %v1542
      %v1544 = vpop.xlane.xlu0 %1543
      %v1545 = vrcp.pop 32.0
      %v1546 = vmul.f32 %v1541, %v1545
      %v1547 = vmul.f32 %v1544, %v1545
      %v1548 = vsub.f32 %v1537, %v1546
      %v1549 = vsub.f32 %v1538, %v1547
      %v1550 = vmul.f32 %v1548, %v1548
      %v1551 = vmul.f32 %v1549, %v1549
      %v1552 = vsel %vm726, %v1550, 0.0
      %1553 = vadd.xlane.f32.xlu0 %v1552
      %v1554 = vpop.xlane.xlu0 %1553
      %v1555 = vsel %vm726, %v1551, 0.0
      %1556 = vadd.xlane.f32.xlu0 %v1555
      %v1557 = vpop.xlane.xlu0 %1556
      %v1558 = vmul.f32 %v1554, %v1545
      %v1559 = vmul.f32 %v1557, %v1545
      %v1560 = vadd.f32 %v1558, 1e-12
      %v1561 = vadd.f32 %v1559, 1e-12
      %v1562 = vrsqrt.pop %v1560
      %v1563 = vrsqrt.pop %v1561
      %v1564 = vmul.f32 %v1548, %v1562
      %v1565 = vmul.f32 %v1549, %v1563
      %v1566 = vlaneseq
      %v1567 = vshrl.u32 %v1566, 7
      %v1568 = vsub.s32 2, %v1567
      %v1569 = vrot.slane %v708, %v1568
      %v1570 = vmul.f32 %v1564, %v1569
      %v1571 = vmul.f32 %v1565, %v1569
      %v1572 = vlaneseq
      %v1573 = vshrl.u32 %v1572, 7
      %v1574 = vsub.s32 3, %v1573
      %v1575 = vrot.slane %v708, %v1574
      %v1576 = vadd.f32 %v1570, %v1575
      %v1577 = vadd.f32 %v1571, %v1575
      %v1578 = vpack.c.bf16 %v1577, %v1576
      %v1579 = vlaneseq
      %v1580 = vshrl.u32 %v1579, 7
      %v1581 = vsub.s32 4, %v1580
      %v1582 = vrot.slane %v708, %v1581
      %v1583 = vunpack.c.h.b16 %v704
      %v1584 = vunpack.c.h.b16 %v705
      %v1585 = vunpack.c.h.b16 %v706
      %v1586 = vunpack.c.h.b16 %v707
      %v1587 = vpack.c.b16 %v1584, %v1583
      %v1588 = vpack.c.b16 %v1586, %v1585
      %v1592 = vsel %vm726, %v1578, 0
      %1594 = vmatprep.subr.bf16.mxu0 0
      %1595 = vmatpush1.bf16.msra.mxu0 %v1587
      %1596 = vmatprep.subr.bf16.mxu0 0
      %1597 = vmatpush1.bf16.msra.mxu0 %v1588
      %1598 = vmatprep.subr.bf16.mxu0 0
      %1599 = vmatpush1.bf16.msra.mxu0 0
      %1600 = vmatprep.subr.bf16.mxu0 0
      %1601 = vmatpush1.bf16.msra.mxu0 0
      %1602 = vmatprep.subr.bf16.mxu0 0
      %1603 = vmatpush1.bf16.msra.mxu0 0
      %1604 = vmatprep.subr.bf16.mxu0 0
      %1605 = vmatpush1.bf16.msra.mxu0 0
      %1606 = vmatprep.subr.bf16.mxu0 0
      %1607 = vmatpush1.bf16.msra.mxu0 0
      %1608 = vmatprep.subr.bf16.mxu0 0
      %1609 = vmatpush1.bf16.msra.mxu0 0
      %1610 = vmatprep.subr.bf16.mxu0 0
      %1611 = vmatpush1.bf16.msra.mxu0 0
      %1612 = vmatprep.subr.bf16.mxu0 0
      %1613 = vmatpush1.bf16.msra.mxu0 0
      %1614 = vmatprep.subr.bf16.mxu0 0
      %1615 = vmatpush1.bf16.msra.mxu0 0
      %1616 = vmatprep.subr.bf16.mxu0 0
      %1617 = vmatpush1.bf16.msra.mxu0 0
      %1618 = vmatprep.subr.bf16.mxu0 0
      %1619 = vmatpush1.bf16.msra.mxu0 0
      %1620 = vmatprep.subr.bf16.mxu0 0
      %1621 = vmatpush1.bf16.msra.mxu0 0
      %1622 = vmatprep.subr.bf16.mxu0 0
      %1623 = vmatpush1.bf16.msra.mxu0 0
      %1624 = vmatprep.subr.bf16.mxu0 0
      %1625 = vmatpush1.bf16.msra.mxu0 0
      %1626 = vmatprep.mubr.bf16.mxu0 0
      %1627 = vmatmul.mubr.bf16.gmra.mrb[0].mxu0 %v1592
      %v1628 = vpop.f32.mrb[0].mxu0
      %v1629 = vadd.f32 %v1582, %v1628
      %v1630 = vpop.f32.mrb[0].mxu0
      %v1631 = vpop.f32.mrb[0].mxu0
      %v1632 = vadd.f32 %v1582, %v1631
      %v1633 = vpop.f32.mrb[0].mxu0
      %1634 = vdwg.mxu0
      %v1635 = vmul.f32 %v1629, %v1629
      %v1636 = vmul.f32 %v1632, %v1632
      %v1637 = vmul.f32 %v1629, %v1635
      %v1638 = vmul.f32 %v1632, %v1636
      %v1639 = vmul.f32 %v1637, 0.044715
      %v1640 = vmul.f32 %v1638, 0.044715
      %v1641 = vadd.f32 %v1629, %v1639
      %v1642 = vadd.f32 %v1632, %v1640
      %v1643 = vmul.f32 %v1641, 0.7978846
      %v1644 = vmul.f32 %v1642, 0.7978846
      %v1645 = vtanh.pop %v1643
      %v1646 = vtanh.pop %v1644
      %v1647 = vadd.f32 %v1645, 1.0
      %v1648 = vadd.f32 %v1646, 1.0
      %v1649 = vmul.f32 %v1647, 0.5
      %v1650 = vmul.f32 %v1648, 0.5
      %v1651 = vmul.f32 %v1629, %v1649
      %v1652 = vmul.f32 %v1632, %v1650
      %v1653 = vpack.c.bf16 %v1652, %v1651
      %v1654 = vld [vmem:[%s529] sm:$0xf]
      %v1655 = vld [vmem:[%s529 + $0x4] sm:$0xf]
      %v1656 = vld [vmem:[%s529 + $0x8] sm:$0xf]
      %v1657 = vld [vmem:[%s529 + $0xc] sm:$0xf]
      %v1658 = vld [vmem:[%s529 + $0x10] sm:$0xf]
      %v1659 = vld [vmem:[%s529 + $0x14] sm:$0xf]
      %v1660 = vld [vmem:[%s529 + $0x18] sm:$0xf]
      %v1661 = vld [vmem:[%s529 + $0x1c] sm:$0xf]
      %v1662 = vlaneseq
      %v1663 = vshrl.u32 %v1662, 7
      %v1664 = vsub.s32 5, %v1663
      %v1665 = vrot.slane %v708, %v1664
      %v1674 = vunpack.c.l.b16 %v1654
      %v1675 = vunpack.c.l.b16 %v1655
      %v1676 = vunpack.c.l.b16 %v1656
      %v1677 = vunpack.c.l.b16 %v1657
      %v1678 = vunpack.c.l.b16 %v1658
      %v1679 = vunpack.c.l.b16 %v1659
      %v1680 = vunpack.c.l.b16 %v1660
      %v1681 = vunpack.c.l.b16 %v1661
      %v1682 = vpack.c.b16 %v1675, %v1674
      %v1683 = vpack.c.b16 %v1677, %v1676
      %v1684 = vpack.c.b16 %v1679, %v1678
      %v1685 = vpack.c.b16 %v1681, %v1680
      %vm1690 = vcmask 523264
      %v1692 = vsel %vm1690, %v1653, 0
      %1694 = vmatprep.subr.bf16.mxu0 0
      %1695 = vmatpush1.bf16.msra.mxu0 %v1682
      %1696 = vmatprep.subr.bf16.mxu0 0
      %1697 = vmatpush1.bf16.msra.mxu0 %v1683
      %1698 = vmatprep.subr.bf16.mxu0 0
      %1699 = vmatpush1.bf16.msra.mxu0 %v1684
      %1700 = vmatprep.subr.bf16.mxu0 0
      %1701 = vmatpush1.bf16.msra.mxu0 %v1685
      %1702 = vmatprep.subr.bf16.mxu0 0
      %1703 = vmatpush1.bf16.msra.mxu0 0
      %1704 = vmatprep.subr.bf16.mxu0 0
      %1705 = vmatpush1.bf16.msra.mxu0 0
      %1706 = vmatprep.subr.bf16.mxu0 0
      %1707 = vmatpush1.bf16.msra.mxu0 0
      %1708 = vmatprep.subr.bf16.mxu0 0
      %1709 = vmatpush1.bf16.msra.mxu0 0
      %1710 = vmatprep.subr.bf16.mxu0 0
      %1711 = vmatpush1.bf16.msra.mxu0 0
      %1712 = vmatprep.subr.bf16.mxu0 0
      %1713 = vmatpush1.bf16.msra.mxu0 0
      %1714 = vmatprep.subr.bf16.mxu0 0
      %1715 = vmatpush1.bf16.msra.mxu0 0
      %1716 = vmatprep.subr.bf16.mxu0 0
      %1717 = vmatpush1.bf16.msra.mxu0 0
      %1718 = vmatprep.subr.bf16.mxu0 0
      %1719 = vmatpush1.bf16.msra.mxu0 0
      %1720 = vmatprep.subr.bf16.mxu0 0
      %1721 = vmatpush1.bf16.msra.mxu0 0
      %1722 = vmatprep.subr.bf16.mxu0 0
      %1723 = vmatpush1.bf16.msra.mxu0 0
      %1724 = vmatprep.subr.bf16.mxu0 0
      %1725 = vmatpush1.bf16.msra.mxu0 0
      %1726 = vmatprep.mubr.bf16.mxu0 0
      %1727 = vmatmul.mubr.bf16.gmra.mrb[0].mxu0 %v1692
      %v1728 = vpop.f32.mrb[0].mxu0
      %v1729 = vadd.f32 %v1665, %v1728
      %v1730 = vpop.f32.mrb[0].mxu0
      %v1731 = vpop.f32.mrb[0].mxu0
      %v1732 = vadd.f32 %v1665, %v1731
      %v1733 = vpop.f32.mrb[0].mxu0
      %1734 = vdwg.mxu0
      %v1735 = vadd.f32 %v1729, %v1576
      %v1736 = vadd.f32 %v1732, %v1577
      %v1737 = vsel %vm726, %v1735, 0.0
      %1738 = vadd.xlane.f32.xlu0 %v1737
      %v1739 = vpop.xlane.xlu0 %1738
      %v1740 = vsel %vm726, %v1736, 0.0
      %1741 = vadd.xlane.f32.xlu0 %v1740
      %v1742 = vpop.xlane.xlu0 %1741
      %v1743 = vmul.f32 %v1739, %v1545
      %v1744 = vmul.f32 %v1742, %v1545
      %v1745 = vsub.f32 %v1735, %v1743
      %v1746 = vsub.f32 %v1736, %v1744
      %v1747 = vmul.f32 %v1745, %v1745
      %v1748 = vmul.f32 %v1746, %v1746
      %v1749 = vsel %vm726, %v1747, 0.0
      %1750 = vadd.xlane.f32.xlu0 %v1749
      %v1751 = vpop.xlane.xlu0 %1750
      %v1752 = vsel %vm726, %v1748, 0.0
      %1753 = vadd.xlane.f32.xlu0 %v1752
      %v1754 = vpop.xlane.xlu0 %1753
      %v1755 = vmul.f32 %v1751, %v1545
      %v1756 = vmul.f32 %v1754, %v1545
      %v1757 = vadd.f32 %v1755, 1e-12
      %v1758 = vadd.f32 %v1756, 1e-12
      %v1759 = vrsqrt.pop %v1757
      %v1760 = vrsqrt.pop %v1758
      %v1761 = vmul.f32 %v1745, %v1759
      %v1762 = vmul.f32 %v1746, %v1760
      %v1763 = vlaneseq
      %v1764 = vshrl.u32 %v1763, 7
      %v1765 = vsub.s32 6, %v1764
      %v1766 = vrot.slane %v708, %v1765
      %v1767 = vmul.f32 %v1761, %v1766
      %v1768 = vmul.f32 %v1762, %v1766
      %v1769 = vlaneseq
      %v1770 = vshrl.u32 %v1769, 7
      %v1771 = vsub.s32 7, %v1770
      %v1772 = vrot.slane %v708, %v1771
      %v1773 = vadd.f32 %v1767, %v1772
      %v1774 = vadd.f32 %v1768, %v1772
      %1775 = vst.msk [vmem:[#allocation2] sm:$0xff] %vm726, %v1773
      %1776 = vst.msk [vmem:[#allocation2 + $0x8] sm:$0xff] %vm726, %v1774
      %p1777 = scmp.eq.s32.totalorder %s31, 1
      // Predicated region
      $region57: #{bibert_embs.1} parent=51 // pred_check
        %p1778 = pneg %p1777
      $region58: #{bibert_embs.1} parent=51 // pred_check_branch
        %1780 = sbr.rel (%p1778) target = $region60
      $region59: #{bibert_embs.1} parent=51 // pred_region
        %v1782 = vrot.slane %v1774, 7
        %vm1784 = vcmask 1040384
        %v1785 = vsel %vm1784, %v1773, %v1782
        %vm1786 = vcmask 254976
        %1787 = vst.msk [vmem:[%s534] sm:$0x3] %vm1786, %v1785
      $region60: #{bibert_embs.1} parent=51 // pred_fallthru
        _
      %p1788 = scmp.lt.s32.totalorder %s30, 1
      %s1789 = scalar_select %p1788, %s30, 1
      %s1790 = smul.addr %s1789, 2
      %s1791 = scalar_lea.vmem %s9, %s1790
      // Predicated region
      $region61: #{bibert_embs.1} parent=51 // pred_check
        %p1792 = pneg %p282
      $region62: #{bibert_embs.1} parent=51 // pred_check_branch
        %1794 = sbr.rel (%p1792) target = $region64
      $region63: #{bibert_embs.1} parent=51 // pred_region
        _
      $region64: #{bibert_embs.1} parent=51 // pred_fallthru
        _
    $region52: #{bibert_embs.1} parent=5 // pred_fallthru
      _
    %p1795 = scmp.le.s32.totalorder 2, %s21
    // Predicated region
    $region65: #{bibert_embs.1} parent=5 // pred_check
      %p1796 = pneg %p1795
    $region66: #{bibert_embs.1} parent=5 // pred_check_branch
      %1798 = sbr.rel (%p1796) target = $region68
    $region67: #{bibert_embs.1} parent=5 // pred_region
      %s1799 = ssub.s32 %s21, 2
      // Predicated region
      $region69: #{bibert_embs.1} parent=67 // pred_check
        %p1800 = pneg %p288
      $region70: #{bibert_embs.1} parent=67 // pred_check_branch
        %1802 = sbr.rel (%p1800) target = $region72
      $region71: #{bibert_embs.1} parent=67 // pred_region
        %p1803 = scmp.lt.s32.totalorder %s32, 1
        %s1804 = scalar_select %p1803, %s32, 1
        %s1805 = smul.addr %s1804, 2
        %s1806 = scalar_lea.vmem %s9, %s1805
      $region72: #{bibert_embs.1} parent=67 // pred_fallthru
        _
    $region68: #{bibert_embs.1} parent=5 // pred_fallthru
      _
  $region6: #{bibert_embs.1} parent=0 // loop_footer
    %s25 = sadd.s32 1, %s21
  $region7: #{bibert_embs.1} parent=0 // loop_footer_branch
    %20 = sbr.rel target = $region3
  $region8: #{bibert_embs.1} parent=0 // loop_exit
    _

</llo_original>
